<compile_context>
chip_gen: v7x
topology: tpu7x:2x2x1
jax: 0.10.0
libtpu: 0.0.40
codegen_flags: <defaults>
</compile_context>

<pallas_src>
import functools

import jax
import jax.numpy as jnp
from jax import lax
from jax.experimental import pallas as pl
from jax.experimental.pallas import tpu as pltpu


def _silu(x):
    return x * jax.nn.sigmoid(x)


def _round_up(a, b):
    return (a + b - 1) // b * b


def _pick_token_tile(tk, e):
    """Routed-path token tile: never below 128, 256 when the avg group allows."""
    avg = tk // max(e, 1)
    return 256 if avg >= 256 else 128


def _pick_de_tile(de):
    """Intermediate-dim tile for the routed experts (bounds VMEM on v7x)."""
    if de <= 512:
        return de
    for t in (512, 256, 128):
        if de % t == 0:
            return t
    return de


def _vmem_limit(footprint_bytes):
    """Footprint-derived VMEM cap: 1.5x headroom, floor 16 MiB, cap 48 MiB."""
    return int(min(48 << 20, max(16 << 20, (footprint_bytes * 3) // 2)))


# --------------------------------------------------------------------------
# Kernels
# --------------------------------------------------------------------------
def grouped_expert_kernel(tile_expert_ref, tile_valid_ref,
                          x_ref, w_ref, g_ref, u_ref, d_ref,
                          o_ref, acc_ref):
    """Grid (token-tile i, De-tile j): one slab of the owning expert's FFN."""
    del tile_expert_ref                       # consumed by the index_maps only
    i = pl.program_id(0)
    j = pl.program_id(1)
    last_j = pl.num_programs(1) - 1
    valid = tile_valid_ref[i] > 0             # tile contains at least one real row

    @pl.when(valid)
    def _():
        x = x_ref[...]                                                   # (TM, H) bf16
        g = jnp.dot(x, g_ref[...], preferred_element_type=jnp.float32)  # (TM, tDe) f32
        u = jnp.dot(x, u_ref[...], preferred_element_type=jnp.float32)
        inter = (_silu(g) * u).astype(d_ref.dtype)      # elementwise in f32, cast for MXU
        y = jnp.dot(inter, d_ref[...], preferred_element_type=jnp.float32)  # (TM, H)
        acc_ref[...] = jnp.where(j == 0, 0.0, acc_ref[...]) + y

    @pl.when(j == last_j)
    def _():
        w = w_ref[...]                        # (TM, 1) routing weight; 0 on padding rows
        # w > 0 mask: padding rows (and skipped tiles' garbage acc) contribute exact 0.
        o_ref[...] = jnp.where(w > 0.0, acc_ref[...] * w, 0.0).astype(o_ref.dtype)


def shared_expert_kernel(x_ref, r_ref, g_ref, u_ref, d_ref, o_ref):
    """Dense shared-expert FFN on a (TM2, H) token tile, fused with `+ routed`."""
    x = x_ref[...]
    g = jnp.dot(x, g_ref[...], preferred_element_type=jnp.float32)
    u = jnp.dot(x, u_ref[...], preferred_element_type=jnp.float32)
    inter = (_silu(g) * u).astype(d_ref.dtype)
    o_ref[...] = r_ref[...] + jnp.dot(inter, d_ref[...],
                                      preferred_element_type=jnp.float32)


# --------------------------------------------------------------------------
# Wrapper
# --------------------------------------------------------------------------
@functools.partial(jax.jit, static_argnames=("num_experts_per_token", "compute_dtype"))
def jit_optimized_moe(x, params, num_experts_per_token, compute_dtype=jnp.bfloat16):
    B, S, H = x.shape
    T = B * S
    K = num_experts_per_token
    x_flat = x.reshape(T, H).astype(jnp.float32)      # f32 only for the tiny router matmul
    x_bf = x_flat.astype(compute_dtype)               # bf16 copy feeds both FFN paths

    ge = params['experts_gate'].astype(compute_dtype)   # (E, H, De)
    ue = params['experts_up'].astype(compute_dtype)     # (E, H, De)
    de = params['experts_down'].astype(compute_dtype)   # (E, De, H)
    sg = params['shared_gate'].astype(compute_dtype)    # (H, Dsh)
    su = params['shared_up'].astype(compute_dtype)      # (H, Dsh)
    sd = params['shared_down'].astype(compute_dtype)    # (Dsh, H)
    E, _, De = ge.shape
    Dsh = sg.shape[1]

    # ---- routing glue (tiny T x E work, kept in f32 so top-k selection
    # ---- matches the f32 reference exactly) --------------------------------
    logits = x_flat @ params['router'].astype(jnp.float32)
    probs = jax.nn.softmax(logits, axis=-1)
    topk_p, topk_i = lax.top_k(probs, K)                 # (T, K)

    TK = T * K
    TM = _pick_token_tile(TK, E)                          # routed token tile (>=128)
    tDe = _pick_de_tile(De)                               # intermediate-dim tile
    n_de = De // tDe

    flat_expert = topk_i.reshape(-1).astype(jnp.int32)    # (TK,)
    flat_prob = topk_p.reshape(-1)
    flat_token = jnp.repeat(jnp.arange(T, dtype=jnp.int32), K)

    order = jnp.argsort(flat_expert)                      # group rows by expert
    sorted_expert = flat_expert[order]
    sorted_token = flat_token[order]
    sorted_prob = flat_prob[order]

    # Pad every expert group to a multiple of TM so each tile has one owner.
    counts = jnp.bincount(flat_expert, length=E)
    padded_counts = (counts + TM - 1) // TM * TM
    ends_pad = jnp.cumsum(padded_counts)
    starts_pad = ends_pad - padded_counts
    starts = jnp.cumsum(counts) - counts
    rank_in_group = jnp.arange(TK, dtype=jnp.int32) - starts[sorted_expert]
    dest = (starts_pad[sorted_expert] + rank_in_group).astype(jnp.int32)

    num_tiles = TK // TM + E              # static bound on sum_e ceil(count_e / TM)
    L = num_tiles * TM

    gather_token = jnp.zeros((L,), jnp.int32).at[dest].set(sorted_token)
    row_weight = (jnp.zeros((L,), jnp.float32).at[dest].set(sorted_prob)
                  .reshape(L, 1))
    tile_start = jnp.arange(num_tiles, dtype=jnp.int32) * TM
    tile_expert = jnp.minimum(
        jnp.searchsorted(ends_pad, tile_start, side='right'),
        E - 1).astype(jnp.int32)                          # owner expert per tile
    tile_valid = (tile_start < ends_pad[-1]).astype(jnp.int32)  # has any real rows

    x_sorted = x_bf[gather_token]                         # (L, H) bf16 gathered tokens

    grouped_footprint = (
        2 * (TM * H * 2 + TM * 4 + 2 * H * tDe * 2 + tDe * H * 2 + TM * H * 2)
        + TM * H * 4)

    routed_sorted = pl.pallas_call(
        grouped_expert_kernel,
        out_shape=jax.ShapeDtypeStruct((L, H), compute_dtype),   # bf16 intermediate
        grid_spec=pltpu.PrefetchScalarGridSpec(
            num_scalar_prefetch=2,
            grid=(num_tiles, n_de),
            in_specs=[
                pl.BlockSpec((TM, H), lambda i, j, te, tv: (i, 0)),    # sorted x
                pl.BlockSpec((TM, 1), lambda i, j, te, tv: (i, 0)),    # routing w
                pl.BlockSpec((None, H, tDe),
                             lambda i, j, te, tv: (te[i], 0, j)),      # gate_e
                pl.BlockSpec((None, H, tDe),
                             lambda i, j, te, tv: (te[i], 0, j)),      # up_e
                pl.BlockSpec((None, tDe, H),
                             lambda i, j, te, tv: (te[i], j, 0)),      # down_e
            ],
            out_specs=pl.BlockSpec((TM, H), lambda i, j, te, tv: (i, 0)),
            scratch_shapes=[pltpu.VMEM((TM, H), jnp.float32)],         # f32 acc
        ),
        compiler_params=pltpu.CompilerParams(
            dimension_semantics=("parallel", "arbitrary"),
            vmem_limit_bytes=_vmem_limit(grouped_footprint)),
    )(tile_expert, tile_valid, x_sorted, row_weight, ge, ue, de)

    # ---- K-way combine: gather + dense reduce (no scatter-add) -------------
    positions = jnp.zeros((TK,), jnp.int32).at[order].set(dest)   # flat row -> padded row
    routed = (routed_sorted[positions].astype(jnp.float32)
              .reshape(T, K, H).sum(axis=1))                      # (T, H) f32

    # ---- shared expert: dense FFN over token tiles, fused with the final add
    TM2 = min(512, _round_up(T, 8))
    T_pad = _round_up(T, TM2)
    x_sh = x_bf
    routed_p = routed
    if T_pad != T:
        x_sh = jnp.pad(x_sh, ((0, T_pad - T), (0, 0)))
        routed_p = jnp.pad(routed_p, ((0, T_pad - T), (0, 0)))

    shared_footprint = (2 * (TM2 * H * 2 + TM2 * H * 4 + TM2 * H * 4)
                        + 2 * (2 * H * Dsh * 2 + Dsh * H * 2))

    out = pl.pallas_call(
        shared_expert_kernel,
        out_shape=jax.ShapeDtypeStruct((T_pad, H), jnp.float32),
        grid=(T_pad // TM2,),
        in_specs=[
            pl.BlockSpec((TM2, H), lambda i: (i, 0)),   # x
            pl.BlockSpec((TM2, H), lambda i: (i, 0)),   # routed output (fused add)
            pl.BlockSpec((H, Dsh), lambda i: (0, 0)),   # shared gate (constant index)
            pl.BlockSpec((H, Dsh), lambda i: (0, 0)),   # shared up
            pl.BlockSpec((Dsh, H), lambda i: (0, 0)),   # shared down
        ],
        out_specs=pl.BlockSpec((TM2, H), lambda i: (i, 0)),
        compiler_params=pltpu.CompilerParams(
            dimension_semantics=("parallel",),
            vmem_limit_bytes=_vmem_limit(shared_footprint)),
    )(x_sh, routed_p, sg, su, sd)

    return out[:T].reshape(B, S, H)


# --------------------------------------------------------------------------
# Pure-JAX reference reproducing the PyTorch forward (f32 throughout).
# --------------------------------------------------------------------------
def reference_moe(x, params, k):
    B, S, H = x.shape
    xf = x.reshape(B * S, H)
    shared = (jax.nn.silu(xf @ params['shared_gate']) *
              (xf @ params['shared_up'])) @ params['shared_down']
    probs = jax.nn.softmax(xf @ params['router'], axis=-1)
    tp, ti = lax.top_k(probs, k)
    out = jnp.zeros_like(xf)
    for e in range(params['experts_gate'].shape[0]):
        w = jnp.sum(jnp.where(ti == e, tp, 0.0), axis=-1, keepdims=True)
        g = jax.nn.silu(xf @ params['experts_gate'][e])
        u = xf @ params['experts_up'][e]
        out = out + ((g * u) @ params['experts_down'][e]) * w
    return (out + shared).reshape(B, S, H)


if __name__ == "__main__":
    key = jax.random.PRNGKey(0)
    B, S, H = 2, 8, 32            # batch, seq, hidden
    E, K = 8, 2                   # n_routed_experts, n_experts_per_token
    D_EXP, D_SH = 64, 64          # expert / shared intermediate dims
    ks = jax.random.split(key, 8)
    sc = 0.05

    x = jax.random.normal(ks[0], (B, S, H), jnp.float32)
    params = {
        'router':       sc * jax.random.normal(ks[1], (H, E), jnp.float32),
        'experts_gate': sc * jax.random.normal(ks[2], (E, H, D_EXP), jnp.float32),
        'experts_up':   sc * jax.random.normal(ks[3], (E, H, D_EXP), jnp.float32),
        'experts_down': sc * jax.random.normal(ks[4], (E, D_EXP, H), jnp.float32),
        'shared_gate':  sc * jax.random.normal(ks[5], (H, D_SH), jnp.float32),
        'shared_up':    sc * jax.random.normal(ks[6], (H, D_SH), jnp.float32),
        'shared_down':  sc * jax.random.normal(ks[7], (D_SH, H), jnp.float32),
    }

    out = jax.block_until_ready(jit_optimized_moe(x, params, K))
    ref = jax.block_until_ready(reference_moe(x, params, K))

    assert out.shape == (B, S, H) and out.dtype == jnp.float32
    err = float(jnp.max(jnp.abs(out - ref)))
    # bf16 matmuls / bf16 routed intermediate vs f32 reference -> loose tolerance;
    # expert selection is done in f32 so routing is exact.
    assert jnp.allclose(out, ref, atol=5e-3, rtol=5e-2), f"max err {err}"
    print("KERNEL_OK")
</pallas_src>

<mosaic_0001>
module attributes {stable_mosaic.version = 11 : i64} {
  func.func private @main(%arg0: i32) attributes {dimension_semantics = [#tpu.dimension_semantics<core_parallel>], iteration_bounds = array<i64: 2>, tpu.core_type = #tpu.core_type<sc_scalar_subcore>, window_params = []} {
    return
  }
}

module attributes {stable_mosaic.version = 11 : i64} {
  func.func private @main(%arg0: i32) attributes {dimension_semantics = [#tpu.dimension_semantics<core_parallel>], iteration_bounds = array<i64: 2>, tpu.core_type = #tpu.core_type<sc_scalar_subcore>, window_params = []} {
    return
  }
}

module attributes {stable_mosaic.version = 11 : i64} {
  func.func @grouped_expert_kernel(%arg0: i32, %arg1: i32, %arg2: memref<8xi32, #tpu.memory_space<smem>>, %arg3: memref<8xi32, #tpu.memory_space<smem>>, %arg4: memref<128x32xbf16, #tpu.memory_space<vmem>>, %arg5: memref<128x1xf32, #tpu.memory_space<vmem>>, %arg6: memref<1x32x64xbf16, #tpu.memory_space<vmem>>, %arg7: memref<1x32x64xbf16, #tpu.memory_space<vmem>>, %arg8: memref<1x64x32xbf16, #tpu.memory_space<vmem>>, %arg9: memref<128x32xbf16, #tpu.memory_space<vmem>>, %arg10: memref<128x32xf32, #tpu.memory_space<vmem>>) attributes {dimension_semantics = [#tpu.dimension_semantics<parallel>, #tpu.dimension_semantics<arbitrary>], iteration_bounds = array<i64: 8, 1>, scalar_prefetch = 2 : i64, scratch_operands = 1 : i64, tpu.core_type = #tpu.core_type<tc>, window_params = [{transform_indices = @transform_0, window_bounds = array<i64: 128, 32>}, {transform_indices = @transform_1, window_bounds = array<i64: 128, 1>}, {transform_indices = @transform_2, window_bounds = array<i64: 1, 32, 64>}, {transform_indices = @transform_3, window_bounds = array<i64: 1, 32, 64>}, {transform_indices = @transform_4, window_bounds = array<i64: 1, 64, 32>}, {transform_indices = @transform_5, window_bounds = array<i64: 128, 32>}]} {
    %0 = arith.index_cast %arg0 : i32 to index
    %1 = memref.load %arg3[%0] : memref<8xi32, #tpu.memory_space<smem>>
    %c0_i32 = arith.constant 0 : i32
    %2 = arith.cmpi sgt, %1, %c0_i32 : i32
    %3 = arith.extui %2 : i1 to i32
    %c0_i32_0 = arith.constant 0 : i32
    %4 = arith.cmpi ne, %3, %c0_i32_0 : i32
    scf.if %4 {
      %c0 = arith.constant 0 : index
      %c0_3 = arith.constant 0 : index
      %8 = vector.load %arg4[%c0, %c0_3] : memref<128x32xbf16, #tpu.memory_space<vmem>>, vector<128x32xbf16>
      %c0_4 = arith.constant 0 : index
      %c0_5 = arith.constant 0 : index
      %c0_6 = arith.constant 0 : index
      %9 = vector.load %arg6[%c0_4, %c0_5, %c0_6] : memref<1x32x64xbf16, #tpu.memory_space<vmem>>, vector<1x32x64xbf16>
      %10 = vector.shape_cast %9 : vector<1x32x64xbf16> to vector<32x64xbf16>
      %cst = arith.constant dense<0.000000e+00> : vector<128x64xf32>
      %11 = tpu.matmul %8, %10, %cst {dimension_numbers = #tpu.dot_dimension_numbers<[1], [0], [0], [1], [0, 0, 1, 1], [], []>} : vector<128x32xbf16>, vector<32x64xbf16>, vector<128x64xf32> -> vector<128x64xf32>
      %c0_7 = arith.constant 0 : index
      %c0_8 = arith.constant 0 : index
      %c0_9 = arith.constant 0 : index
      %12 = vector.load %arg7[%c0_7, %c0_8, %c0_9] : memref<1x32x64xbf16, #tpu.memory_space<vmem>>, vector<1x32x64xbf16>
      %13 = vector.shape_cast %12 : vector<1x32x64xbf16> to vector<32x64xbf16>
      %cst_10 = arith.constant dense<0.000000e+00> : vector<128x64xf32>
      %14 = tpu.matmul %8, %13, %cst_10 {dimension_numbers = #tpu.dot_dimension_numbers<[1], [0], [0], [1], [0, 0, 1, 1], [], []>} : vector<128x32xbf16>, vector<32x64xbf16>, vector<128x64xf32> -> vector<128x64xf32>
      %15 = arith.negf %11 : vector<128x64xf32>
      %16 = math.exp %15 : vector<128x64xf32>
      %cst_11 = arith.constant 1.000000e+00 : f32
      %17 = vector.broadcast %cst_11 : f32 to vector<128x64xf32>
      %18 = arith.addf %17, %16 : vector<128x64xf32>
      %19 = arith.divf %17, %18 : vector<128x64xf32>
      %20 = arith.mulf %11, %19 : vector<128x64xf32>
      %21 = arith.mulf %20, %14 : vector<128x64xf32>
      %22 = arith.truncf %21 : vector<128x64xf32> to vector<128x64xbf16>
      %c0_12 = arith.constant 0 : index
      %c0_13 = arith.constant 0 : index
      %c0_14 = arith.constant 0 : index
      %23 = vector.load %arg8[%c0_12, %c0_13, %c0_14] : memref<1x64x32xbf16, #tpu.memory_space<vmem>>, vector<1x64x32xbf16>
      %24 = vector.shape_cast %23 : vector<1x64x32xbf16> to vector<64x32xbf16>
      %cst_15 = arith.constant dense<0.000000e+00> : vector<128x32xf32>
      %25 = tpu.matmul %22, %24, %cst_15 {dimension_numbers = #tpu.dot_dimension_numbers<[1], [0], [0], [1], [0, 0, 1, 1], [], []>} : vector<128x64xbf16>, vector<64x32xbf16>, vector<128x32xf32> -> vector<128x32xf32>
      %c0_i32_16 = arith.constant 0 : i32
      %26 = arith.cmpi eq, %arg1, %c0_i32_16 : i32
      %c0_17 = arith.constant 0 : index
      %c0_18 = arith.constant 0 : index
      %27 = vector.load %arg10[%c0_17, %c0_18] : memref<128x32xf32, #tpu.memory_space<vmem>>, vector<128x32xf32>
      %cst_19 = arith.constant 0.000000e+00 : f32
      %28 = vector.broadcast %cst_19 : f32 to vector<128x32xf32>
      %29 = arith.select %26, %28, %27 : vector<128x32xf32>
      %30 = arith.addf %29, %25 : vector<128x32xf32>
      %c0_20 = arith.constant 0 : index
      %c0_21 = arith.constant 0 : index
      %31 = vector.load %arg10[%c0_20, %c0_21] : memref<128x32xf32, #tpu.memory_space<vmem>>, vector<128x32xf32>
      tpu.vector_store %arg10[%c0_20, %c0_21], %30 {strides = array<i32>} : memref<128x32xf32, #tpu.memory_space<vmem>>, vector<128x32xf32>,
    } else {
    }
    %c0_i32_1 = arith.constant 0 : i32
    %5 = arith.cmpi eq, %arg1, %c0_i32_1 : i32
    %6 = arith.extui %5 : i1 to i32
    %c0_i32_2 = arith.constant 0 : i32
    %7 = arith.cmpi ne, %6, %c0_i32_2 : i32
    scf.if %7 {
      %c0 = arith.constant 0 : index
      %c0_3 = arith.constant 0 : index
      %8 = vector.load %arg5[%c0, %c0_3] : memref<128x1xf32, #tpu.memory_space<vmem>>, vector<128x1xf32>
      %cst = arith.constant 0.000000e+00 : f32
      %9 = vector.broadcast %cst : f32 to vector<128x1xf32>
      %10 = arith.cmpf ogt, %8, %9 : vector<128x1xf32>
      %c0_4 = arith.constant 0 : index
      %c0_5 = arith.constant 0 : index
      %11 = vector.load %arg10[%c0_4, %c0_5] : memref<128x32xf32, #tpu.memory_space<vmem>>, vector<128x32xf32>
      %12 = vector.broadcast %8 : vector<128x1xf32> to vector<128x32xf32>
      %13 = arith.mulf %11, %12 : vector<128x32xf32>
      %cst_6 = arith.constant 0.000000e+00 : f32
      %14 = vector.shape_cast %10 : vector<128x1xi1> to vector<128x1xi1>
      %15 = vector.broadcast %14 : vector<128x1xi1> to vector<128x32xi1>
      %16 = vector.broadcast %cst_6 : f32 to vector<128x32xf32>
      %17 = arith.select %15, %13, %16 : vector<128x32xi1>, vector<128x32xf32>
      %18 = arith.truncf %17 : vector<128x32xf32> to vector<128x32xbf16>
      %c0_7 = arith.constant 0 : index
      %c0_8 = arith.constant 0 : index
      %19 = vector.load %arg9[%c0_7, %c0_8] : memref<128x32xbf16, #tpu.memory_space<vmem>>, vector<128x32xbf16>
      tpu.vector_store %arg9[%c0_7, %c0_8], %18 {strides = array<i32>} : memref<128x32xbf16, #tpu.memory_space<vmem>>, vector<128x32xbf16>,
    } else {
    }
    return
  }
  func.func @transform_0(%arg0: i32, %arg1: i32, %arg2: memref<8xi32, #tpu.memory_space<smem>>, %arg3: memref<8xi32, #tpu.memory_space<smem>>) -> (i32, i32) {
    %c0_i32 = arith.constant 0 : i32
    %c0_i32_0 = arith.constant 0 : i32
    return %arg0, %c0_i32 : i32, i32
  }
  func.func @transform_1(%arg0: i32, %arg1: i32, %arg2: memref<8xi32, #tpu.memory_space<smem>>, %arg3: memref<8xi32, #tpu.memory_space<smem>>) -> (i32, i32) {
    %c0_i32 = arith.constant 0 : i32
    %c0_i32_0 = arith.constant 0 : i32
    return %arg0, %c0_i32 : i32, i32
  }
  func.func @transform_2(%arg0: i32, %arg1: i32, %arg2: memref<8xi32, #tpu.memory_space<smem>>, %arg3: memref<8xi32, #tpu.memory_space<smem>>) -> (i32, i32, i32) {
    %0 = arith.index_cast %arg0 : i32 to index
    %1 = memref.load %arg2[%0] : memref<8xi32, #tpu.memory_space<smem>>
    %c0_i32 = arith.constant 0 : i32
    %c0_i32_0 = arith.constant 0 : i32
    return %1, %c0_i32, %arg1 : i32, i32, i32
  }
  func.func @transform_3(%arg0: i32, %arg1: i32, %arg2: memref<8xi32, #tpu.memory_space<smem>>, %arg3: memref<8xi32, #tpu.memory_space<smem>>) -> (i32, i32, i32) {
    %0 = arith.index_cast %arg0 : i32 to index
    %1 = memref.load %arg2[%0] : memref<8xi32, #tpu.memory_space<smem>>
    %c0_i32 = arith.constant 0 : i32
    %c0_i32_0 = arith.constant 0 : i32
    return %1, %c0_i32, %arg1 : i32, i32, i32
  }
  func.func @transform_4(%arg0: i32, %arg1: i32, %arg2: memref<8xi32, #tpu.memory_space<smem>>, %arg3: memref<8xi32, #tpu.memory_space<smem>>) -> (i32, i32, i32) {
    %0 = arith.index_cast %arg0 : i32 to index
    %1 = memref.load %arg2[%0] : memref<8xi32, #tpu.memory_space<smem>>
    %c0_i32 = arith.constant 0 : i32
    %c0_i32_0 = arith.constant 0 : i32
    return %1, %arg1, %c0_i32 : i32, i32, i32
  }
  func.func @transform_5(%arg0: i32, %arg1: i32, %arg2: memref<8xi32, #tpu.memory_space<smem>>, %arg3: memref<8xi32, #tpu.memory_space<smem>>) -> (i32, i32) {
    %c0_i32 = arith.constant 0 : i32
    %c0_i32_0 = arith.constant 0 : i32
    return %arg0, %c0_i32 : i32, i32
  }
}

module attributes {stable_mosaic.version = 11 : i64} {
  func.func @shared_expert_kernel(%arg0: i32, %arg1: memref<16x32xbf16, #tpu.memory_space<vmem>>, %arg2: memref<16x32xf32, #tpu.memory_space<vmem>>, %arg3: memref<32x64xbf16, #tpu.memory_space<vmem>>, %arg4: memref<32x64xbf16, #tpu.memory_space<vmem>>, %arg5: memref<64x32xbf16, #tpu.memory_space<vmem>>, %arg6: memref<16x32xf32, #tpu.memory_space<vmem>>) attributes {dimension_semantics = [#tpu.dimension_semantics<parallel>], iteration_bounds = array<i64: 1>, scalar_prefetch = 0 : i64, scratch_operands = 0 : i64, tpu.core_type = #tpu.core_type<tc>, window_params = [{transform_indices = @transform_0, window_bounds = array<i64: 16, 32>}, {transform_indices = @transform_1, window_bounds = array<i64: 16, 32>}, {pipeline_mode = #tpu.pipeline_mode<synchronous>, transform_indices = @transform_2, window_bounds = array<i64: 32, 64>}, {pipeline_mode = #tpu.pipeline_mode<synchronous>, transform_indices = @transform_3, window_bounds = array<i64: 32, 64>}, {pipeline_mode = #tpu.pipeline_mode<synchronous>, transform_indices = @transform_4, window_bounds = array<i64: 64, 32>}, {transform_indices = @transform_5, window_bounds = array<i64: 16, 32>}]} {
    %c0 = arith.constant 0 : index
    %c0_0 = arith.constant 0 : index
    %0 = vector.load %arg1[%c0, %c0_0] : memref<16x32xbf16, #tpu.memory_space<vmem>>, vector<16x32xbf16>
    %c0_1 = arith.constant 0 : index
    %c0_2 = arith.constant 0 : index
    %1 = vector.load %arg3[%c0_1, %c0_2] : memref<32x64xbf16, #tpu.memory_space<vmem>>, vector<32x64xbf16>
    %cst = arith.constant dense<0.000000e+00> : vector<16x64xf32>
    %2 = tpu.matmul %0, %1, %cst {dimension_numbers = #tpu.dot_dimension_numbers<[1], [0], [0], [1], [0, 0, 1, 1], [], []>} : vector<16x32xbf16>, vector<32x64xbf16>, vector<16x64xf32> -> vector<16x64xf32>
    %c0_3 = arith.constant 0 : index
    %c0_4 = arith.constant 0 : index
    %3 = vector.load %arg4[%c0_3, %c0_4] : memref<32x64xbf16, #tpu.memory_space<vmem>>, vector<32x64xbf16>
    %cst_5 = arith.constant dense<0.000000e+00> : vector<16x64xf32>
    %4 = tpu.matmul %0, %3, %cst_5 {dimension_numbers = #tpu.dot_dimension_numbers<[1], [0], [0], [1], [0, 0, 1, 1], [], []>} : vector<16x32xbf16>, vector<32x64xbf16>, vector<16x64xf32> -> vector<16x64xf32>
    %5 = arith.negf %2 : vector<16x64xf32>
    %6 = math.exp %5 : vector<16x64xf32>
    %cst_6 = arith.constant 1.000000e+00 : f32
    %7 = vector.broadcast %cst_6 : f32 to vector<16x64xf32>
    %8 = arith.addf %7, %6 : vector<16x64xf32>
    %9 = arith.divf %7, %8 : vector<16x64xf32>
    %10 = arith.mulf %2, %9 : vector<16x64xf32>
    %11 = arith.mulf %10, %4 : vector<16x64xf32>
    %12 = arith.truncf %11 : vector<16x64xf32> to vector<16x64xbf16>
    %c0_7 = arith.constant 0 : index
    %c0_8 = arith.constant 0 : index
    %13 = vector.load %arg2[%c0_7, %c0_8] : memref<16x32xf32, #tpu.memory_space<vmem>>, vector<16x32xf32>
    %c0_9 = arith.constant 0 : index
    %c0_10 = arith.constant 0 : index
    %14 = vector.load %arg5[%c0_9, %c0_10] : memref<64x32xbf16, #tpu.memory_space<vmem>>, vector<64x32xbf16>
    %cst_11 = arith.constant dense<0.000000e+00> : vector<16x32xf32>
    %15 = tpu.matmul %12, %14, %cst_11 {dimension_numbers = #tpu.dot_dimension_numbers<[1], [0], [0], [1], [0, 0, 1, 1], [], []>} : vector<16x64xbf16>, vector<64x32xbf16>, vector<16x32xf32> -> vector<16x32xf32>
    %16 = arith.addf %13, %15 : vector<16x32xf32>
    %c0_12 = arith.constant 0 : index
    %c0_13 = arith.constant 0 : index
    %17 = vector.load %arg6[%c0_12, %c0_13] : memref<16x32xf32, #tpu.memory_space<vmem>>, vector<16x32xf32>
    tpu.vector_store %arg6[%c0_12, %c0_13], %16 {strides = array<i32>} : memref<16x32xf32, #tpu.memory_space<vmem>>, vector<16x32xf32>,
    return
  }
  func.func @transform_0(%arg0: i32) -> (i32, i32) {
    %c0_i32 = arith.constant 0 : i32
    %c0_i32_0 = arith.constant 0 : i32
    return %arg0, %c0_i32 : i32, i32
  }
  func.func @transform_1(%arg0: i32) -> (i32, i32) {
    %c0_i32 = arith.constant 0 : i32
    %c0_i32_0 = arith.constant 0 : i32
    return %arg0, %c0_i32 : i32, i32
  }
  func.func @transform_2(%arg0: i32) -> (i32, i32) {
    %c0_i32 = arith.constant 0 : i32
    %c0_i32_0 = arith.constant 0 : i32
    %c0_i32_1 = arith.constant 0 : i32
    return %c0_i32, %c0_i32_0 : i32, i32
  }
  func.func @transform_3(%arg0: i32) -> (i32, i32) {
    %c0_i32 = arith.constant 0 : i32
    %c0_i32_0 = arith.constant 0 : i32
    %c0_i32_1 = arith.constant 0 : i32
    return %c0_i32, %c0_i32_0 : i32, i32
  }
  func.func @transform_4(%arg0: i32) -> (i32, i32) {
    %c0_i32 = arith.constant 0 : i32
    %c0_i32_0 = arith.constant 0 : i32
    %c0_i32_1 = arith.constant 0 : i32
    return %c0_i32, %c0_i32_0 : i32, i32
  }
  func.func @transform_5(%arg0: i32) -> (i32, i32) {
    %c0_i32 = arith.constant 0 : i32
    %c0_i32_0 = arith.constant 0 : i32
    return %arg0, %c0_i32 : i32, i32
  }
}

</mosaic_0001>

<llo_original>
// kernel: custom-call
$region0: #{custom-call}
  %s0 = inlined_call_operand.vmem [shape: u32[8], index: 0, kind: output, shape index: {}]

// kernel: jit_optimized_moe.3
$region0: #{jit_optimized_moe.3}
  #allocation0 [shape = 'u32[]', space=smem, size = 0x4, offset = 0x4, fixed_abs, tag = 'smem constant byte address 0x4 - core index']
  #allocation1 [shape = 'u32[144,128]{1,0:T(1,128)}', space=vmem, size = 0x12000, scoped, tag = 'internal scratch']
  %s0 = inlined_call_operand.vmem [shape: bf16[16,32], index: 0, kind: input, shape index: {}]
  %s1 = inlined_call_operand.vmem [shape: f32[16,32], index: 1, kind: input, shape index: {}]
  %s2 = inlined_call_operand.vmem [shape: bf16[32,64], index: 2, kind: input, shape index: {}]
  %s3 = inlined_call_operand.vmem [shape: bf16[32,64], index: 3, kind: input, shape index: {}]
  %s4 = inlined_call_operand.vmem [shape: bf16[64,32], index: 4, kind: input, shape index: {}]
  %s5 = inlined_call_operand.hbm [shape: f32[16,32], index: 5, kind: output, shape index: {}]
  %s6 = sld [smem:[#allocation0]]
  $region30: #{jit_optimized_moe.3} parent=0
    _
  %s8 = ssub.s32 1, %s6
  %s9 = scalar_select 0, %s8, %s6
  $region1: #{jit_optimized_moe.3} parent=0
    #allocation2 [shape = 'u8[8192]{0}', space=vmem, size = 0x2000, scoped, tag = 'output window, operand 0, single buffered']
    #allocation3 [shape = 's32[1]{0}', space=sflag, size = 0x4, scoped, tag = 'scoped memory for jit_optimized_moe.3']
    %10 = vsyncpa [#allocation3], 0
    // Predicated region
    $region2: #{jit_optimized_moe.3} parent=1 // pred_check
      _
    $region3: #{jit_optimized_moe.3} parent=1 // pred_check_branch
      %12 = sbr.rel (0) target = $region5
    $region4: #{jit_optimized_moe.3} parent=1 // pred_region
      _
    $region5: #{jit_optimized_moe.3} parent=1 // pred_fallthru
      _
    // Predicated region
    $region6: #{jit_optimized_moe.3} parent=1 // pred_check
      _
    $region7: #{jit_optimized_moe.3} parent=1 // pred_check_branch
      %14 = sbr.rel (0) target = $region9
    $region8: #{jit_optimized_moe.3} parent=1 // pred_region
      _
    $region9: #{jit_optimized_moe.3} parent=1 // pred_fallthru
      _
    // Predicated region
    $region10: #{jit_optimized_moe.3} parent=1 // pred_check
      _
    $region11: #{jit_optimized_moe.3} parent=1 // pred_check_branch
      %16 = sbr.rel (0) target = $region13
    $region12: #{jit_optimized_moe.3} parent=1 // pred_region
      _
    $region13: #{jit_optimized_moe.3} parent=1 // pred_fallthru
      _
    // Predicated region
    $region14: #{jit_optimized_moe.3} parent=1 // pred_check
      _
    $region15: #{jit_optimized_moe.3} parent=1 // pred_check_branch
      %18 = sbr.rel (0) target = $region17
    $region16: #{jit_optimized_moe.3} parent=1 // pred_region
      _
    $region17: #{jit_optimized_moe.3} parent=1 // pred_fallthru
      _
    // Predicated region
    $region18: #{jit_optimized_moe.3} parent=1 // pred_check
      _
    $region19: #{jit_optimized_moe.3} parent=1 // pred_check_branch
      %20 = sbr.rel (0) target = $region21
    $region20: #{jit_optimized_moe.3} parent=1 // pred_region
      _
    $region21: #{jit_optimized_moe.3} parent=1 // pred_fallthru
      _
    %v22 = vld [vmem:[%s0] sm:$0xf]
    %v23 = vld [vmem:[%s0 + $0x4] sm:$0xf]
    %v24 = vld [vmem:[%s2] sm:$0xf]
    %v25 = vld [vmem:[%s2 + $0x4] sm:$0xf]
    %v26 = vld [vmem:[%s2 + $0x8] sm:$0xf]
    %v27 = vld [vmem:[%s2 + $0xc] sm:$0xf]
    %v30 = vunpack.c.l.b16 %v22
    %v31 = vunpack.c.l.b16 %v23
    %v32 = vpack.c.b16 %v31, %v30
    %v37 = vunpack.c.l.b16 %v24
    %v38 = vunpack.c.l.b16 %v25
    %v39 = vunpack.c.l.b16 %v26
    %v40 = vunpack.c.l.b16 %v27
    %v41 = vpack.c.b16 %v38, %v37
    %v42 = vpack.c.b16 %v40, %v39
    %vm45 = vcmask 261120
    %v47 = vsel %vm45, %v32, 0
    %49 = vmatprep.subr.bf16.mxu0 0
    %50 = vmatpush1.bf16.msra.mxu0 %v41
    %51 = vmatprep.subr.bf16.mxu0 0
    %52 = vmatpush1.bf16.msra.mxu0 %v42
    %53 = vmatprep.subr.bf16.mxu0 0
    %54 = vmatpush1.bf16.msra.mxu0 0
    %55 = vmatprep.subr.bf16.mxu0 0
    %56 = vmatpush1.bf16.msra.mxu0 0
    %57 = vmatprep.subr.bf16.mxu0 0
    %58 = vmatpush1.bf16.msra.mxu0 0
    %59 = vmatprep.subr.bf16.mxu0 0
    %60 = vmatpush1.bf16.msra.mxu0 0
    %61 = vmatprep.subr.bf16.mxu0 0
    %62 = vmatpush1.bf16.msra.mxu0 0
    %63 = vmatprep.subr.bf16.mxu0 0
    %64 = vmatpush1.bf16.msra.mxu0 0
    %65 = vmatprep.subr.bf16.mxu0 0
    %66 = vmatpush1.bf16.msra.mxu0 0
    %67 = vmatprep.subr.bf16.mxu0 0
    %68 = vmatpush1.bf16.msra.mxu0 0
    %69 = vmatprep.subr.bf16.mxu0 0
    %70 = vmatpush1.bf16.msra.mxu0 0
    %71 = vmatprep.subr.bf16.mxu0 0
    %72 = vmatpush1.bf16.msra.mxu0 0
    %73 = vmatprep.subr.bf16.mxu0 0
    %74 = vmatpush1.bf16.msra.mxu0 0
    %75 = vmatprep.subr.bf16.mxu0 0
    %76 = vmatpush1.bf16.msra.mxu0 0
    %77 = vmatprep.subr.bf16.mxu0 0
    %78 = vmatpush1.bf16.msra.mxu0 0
    %79 = vmatprep.subr.bf16.mxu0 0
    %80 = vmatpush1.bf16.msra.mxu0 0
    %81 = vmatprep.mubr.bf16.mxu0 0
    %82 = vmatmul.mubr.bf16.gmra.mrb[0].mxu0 %v47
    %v83 = vpop.f32.mrb[0].mxu0
    %v84 = vadd.f32 0.0, %v83
    %v85 = vpop.f32.mrb[0].mxu0
    %v86 = vpop.f32.mrb[0].mxu0
    %v87 = vadd.f32 0.0, %v86
    %v88 = vpop.f32.mrb[0].mxu0
    %89 = vdwg.mxu0
    %v90 = vld [vmem:[%s3] sm:$0xf]
    %v91 = vld [vmem:[%s3 + $0x4] sm:$0xf]
    %v92 = vld [vmem:[%s3 + $0x8] sm:$0xf]
    %v93 = vld [vmem:[%s3 + $0xc] sm:$0xf]
    %v98 = vunpack.c.l.b16 %v90
    %v99 = vunpack.c.l.b16 %v91
    %v100 = vunpack.c.l.b16 %v92
    %v101 = vunpack.c.l.b16 %v93
    %v102 = vpack.c.b16 %v99, %v98
    %v103 = vpack.c.b16 %v101, %v100
    %106 = vmatprep.subr.bf16.mxu0 0
    %107 = vmatpush1.bf16.msra.mxu0 %v102
    %108 = vmatprep.subr.bf16.mxu0 0
    %109 = vmatpush1.bf16.msra.mxu0 %v103
    %110 = vmatprep.subr.bf16.mxu0 0
    %111 = vmatpush1.bf16.msra.mxu0 0
    %112 = vmatprep.subr.bf16.mxu0 0
    %113 = vmatpush1.bf16.msra.mxu0 0
    %114 = vmatprep.subr.bf16.mxu0 0
    %115 = vmatpush1.bf16.msra.mxu0 0
    %116 = vmatprep.subr.bf16.mxu0 0
    %117 = vmatpush1.bf16.msra.mxu0 0
    %118 = vmatprep.subr.bf16.mxu0 0
    %119 = vmatpush1.bf16.msra.mxu0 0
    %120 = vmatprep.subr.bf16.mxu0 0
    %121 = vmatpush1.bf16.msra.mxu0 0
    %122 = vmatprep.subr.bf16.mxu0 0
    %123 = vmatpush1.bf16.msra.mxu0 0
    %124 = vmatprep.subr.bf16.mxu0 0
    %125 = vmatpush1.bf16.msra.mxu0 0
    %126 = vmatprep.subr.bf16.mxu0 0
    %127 = vmatpush1.bf16.msra.mxu0 0
    %128 = vmatprep.subr.bf16.mxu0 0
    %129 = vmatpush1.bf16.msra.mxu0 0
    %130 = vmatprep.subr.bf16.mxu0 0
    %131 = vmatpush1.bf16.msra.mxu0 0
    %132 = vmatprep.subr.bf16.mxu0 0
    %133 = vmatpush1.bf16.msra.mxu0 0
    %134 = vmatprep.subr.bf16.mxu0 0
    %135 = vmatpush1.bf16.msra.mxu0 0
    %136 = vmatprep.subr.bf16.mxu0 0
    %137 = vmatpush1.bf16.msra.mxu0 0
    %138 = vmatprep.mubr.bf16.mxu0 0
    %139 = vmatmul.mubr.bf16.gmra.mrb[0].mxu0 %v47
    %v140 = vpop.f32.mrb[0].mxu0
    %v141 = vadd.f32 0.0, %v140
    %v142 = vpop.f32.mrb[0].mxu0
    %v143 = vpop.f32.mrb[0].mxu0
    %v144 = vadd.f32 0.0, %v143
    %v145 = vpop.f32.mrb[0].mxu0
    %146 = vdwg.mxu0
    %v147 = vxor.u32 %v84, 2147483648
    %v148 = vxor.u32 %v87, 2147483648
    %v149 = vmul.f32 %v147, 1.442695
    %v150 = vpow.pop %v149
    %v151 = vmul.f32 %v148, 1.442695
    %v152 = vpow.pop %v151
    %v153 = vadd.f32 %v150, 1.0
    %v154 = vadd.f32 %v152, 1.0
    %v155 = vrcp.pop %v153
    %v156 = vmul.f32 1.0, %v155
    %v157 = vrcp.pop %v154
    %v158 = vmul.f32 1.0, %v157
    %v159 = vmul.f32 %v84, %v156
    %v160 = vmul.f32 %v87, %v158
    %v161 = vmul.f32 %v159, %v141
    %v162 = vmul.f32 %v160, %v144
    %v163 = vpack.c.bf16 %v162, %v161
    %v164 = vld [vmem:[%s1] sm:$0xff]
    %v165 = vld [vmem:[%s1 + $0x8] sm:$0xff]
    %v166 = vld [vmem:[%s4] sm:$0xf]
    %v167 = vld [vmem:[%s4 + $0x4] sm:$0xf]
    %v168 = vld [vmem:[%s4 + $0x8] sm:$0xf]
    %v169 = vld [vmem:[%s4 + $0xc] sm:$0xf]
    %v170 = vld [vmem:[%s4 + $0x10] sm:$0xf]
    %v171 = vld [vmem:[%s4 + $0x14] sm:$0xf]
    %v172 = vld [vmem:[%s4 + $0x18] sm:$0xf]
    %v173 = vld [vmem:[%s4 + $0x1c] sm:$0xf]
    %v182 = vunpack.c.l.b16 %v166
    %v183 = vunpack.c.l.b16 %v167
    %v184 = vunpack.c.l.b16 %v168
    %v185 = vunpack.c.l.b16 %v169
    %v186 = vunpack.c.l.b16 %v170
    %v187 = vunpack.c.l.b16 %v171
    %v188 = vunpack.c.l.b16 %v172
    %v189 = vunpack.c.l.b16 %v173
    %v190 = vpack.c.b16 %v183, %v182
    %v191 = vpack.c.b16 %v185, %v184
    %v192 = vpack.c.b16 %v187, %v186
    %v193 = vpack.c.b16 %v189, %v188
    %vm198 = vcmask 523264
    %v200 = vsel %vm198, %v163, 0
    %202 = vmatprep.subr.bf16.mxu0 0
    %203 = vmatpush1.bf16.msra.mxu0 %v190
    %204 = vmatprep.subr.bf16.mxu0 0
    %205 = vmatpush1.bf16.msra.mxu0 %v191
    %206 = vmatprep.subr.bf16.mxu0 0
    %207 = vmatpush1.bf16.msra.mxu0 %v192
    %208 = vmatprep.subr.bf16.mxu0 0
    %209 = vmatpush1.bf16.msra.mxu0 %v193
    %210 = vmatprep.subr.bf16.mxu0 0
    %211 = vmatpush1.bf16.msra.mxu0 0
    %212 = vmatprep.subr.bf16.mxu0 0
    %213 = vmatpush1.bf16.msra.mxu0 0
    %214 = vmatprep.subr.bf16.mxu0 0
    %215 = vmatpush1.bf16.msra.mxu0 0
    %216 = vmatprep.subr.bf16.mxu0 0
    %217 = vmatpush1.bf16.msra.mxu0 0
    %218 = vmatprep.subr.bf16.mxu0 0
    %219 = vmatpush1.bf16.msra.mxu0 0
    %220 = vmatprep.subr.bf16.mxu0 0
    %221 = vmatpush1.bf16.msra.mxu0 0
    %222 = vmatprep.subr.bf16.mxu0 0
    %223 = vmatpush1.bf16.msra.mxu0 0
    %224 = vmatprep.subr.bf16.mxu0 0
    %225 = vmatpush1.bf16.msra.mxu0 0
    %226 = vmatprep.subr.bf16.mxu0 0
    %227 = vmatpush1.bf16.msra.mxu0 0
    %228 = vmatprep.subr.bf16.mxu0 0
    %229 = vmatpush1.bf16.msra.mxu0 0
    %230 = vmatprep.subr.bf16.mxu0 0
    %231 = vmatpush1.bf16.msra.mxu0 0
    %232 = vmatprep.subr.bf16.mxu0 0
    %233 = vmatpush1.bf16.msra.mxu0 0
    %234 = vmatprep.mubr.bf16.mxu0 0
    %235 = vmatmul.mubr.bf16.gmra.mrb[0].mxu0 %v200
    %v236 = vpop.f32.mrb[0].mxu0
    %v237 = vadd.f32 0.0, %v236
    %v238 = vpop.f32.mrb[0].mxu0
    %v239 = vpop.f32.mrb[0].mxu0
    %v240 = vadd.f32 0.0, %v239
    %v241 = vpop.f32.mrb[0].mxu0
    %242 = vdwg.mxu0
    %v243 = vadd.f32 %v164, %v237
    %v244 = vadd.f32 %v165, %v240
    %245 = vst.msk [vmem:[#allocation2] sm:$0xff] %vm45, %v243
    %246 = vst.msk [vmem:[#allocation2 + $0x8] sm:$0xff] %vm45, %v244
    // Predicated region
    $region22: #{jit_optimized_moe.3} parent=1 // pred_check
      _
    $region23: #{jit_optimized_moe.3} parent=1 // pred_check_branch
      %248 = sbr.rel (0) target = $region25
    $region24: #{jit_optimized_moe.3} parent=1 // pred_region
      %s250 = ssub.s32 256, 256
      %251 = vsyncadd [#allocation3], %s250
      %s252 = sshll.u32 [#allocation2], 4
      %s253 = int_to_ptr.vmem [resolvable:$true] %s252
      %258 = dma.vmem_to_hbm [thread:$0]  %s253, 256, %s5, [#allocation3], 128, 128, 8
    $region25: #{jit_optimized_moe.3} parent=1 // pred_fallthru
      _
    // Predicated region
    $region26: #{jit_optimized_moe.3} parent=1 // pred_check
      _
    $region27: #{jit_optimized_moe.3} parent=1 // pred_check_branch
      %260 = sbr.rel (0) target = $region29
    $region28: #{jit_optimized_moe.3} parent=1 // pred_region
      %261 = dma.done [#allocation3], 256
    $region29: #{jit_optimized_moe.3} parent=1 // pred_fallthru
      _
    %262 = vsyncpa [#allocation3], 1

// kernel: jit_optimized_moe.2
$region0: #{jit_optimized_moe.2}
  #allocation0 [shape = 'u32[]', space=smem, size = 0x4, offset = 0x4, fixed_abs, tag = 'smem constant byte address 0x4 - core index']
  #allocation1 [shape = 'u32[144,128]{1,0:T(1,128)}', space=vmem, size = 0x12000, scoped, tag = 'internal scratch']
  #allocation2 [shape = 'f32[128,32]{1,0:T(8,128)}', space=vmem, size = 0x10000, scoped, tag = 'scratch operand']
  #allocation3 [shape = 's32[1]{0}', space=sflag, size = 0x4, scoped, tag = 'scoped memory for jit_optimized_moe.2']
  #allocation4 [shape = 'u8[512]{0}', space=smem, size = 0x200, scoped, tag = 'prefetched SMEM operand 0']
  #allocation5 [shape = 'u8[512]{0}', space=smem, size = 0x200, scoped, tag = 'prefetched SMEM operand 1']
  %s0 = inlined_call_operand.vmem [shape: s32[8], index: 0, kind: input, shape index: {}]
  %s1 = inlined_call_operand.vmem [shape: s32[8], index: 1, kind: input, shape index: {}]
  %s2 = inlined_call_operand.vmem [shape: bf16[1024,32], index: 2, kind: input, shape index: {}]
  %s3 = inlined_call_operand.vmem [shape: f32[1024,1], index: 3, kind: input, shape index: {}]
  %s4 = inlined_call_operand.vmem [shape: bf16[8,32,64], index: 4, kind: input, shape index: {}]
  %s5 = inlined_call_operand.vmem [shape: bf16[8,32,64], index: 5, kind: input, shape index: {}]
  %s6 = inlined_call_operand.vmem [shape: bf16[8,64,32], index: 6, kind: input, shape index: {}]
  %s7 = inlined_call_operand.vmem [shape: bf16[1024,32], index: 7, kind: output, shape index: {}]
  %s8 = sld [smem:[#allocation0]]
  $region61: #{jit_optimized_moe.2} parent=0
    _
  %s10 = ssub.s32 1, %s8
  %s11 = scalar_select 0, %s10, %s8
  %s12 = sshll.u32 %s0, 4
  %s13 = int_to_ptr.vmem [resolvable:$true] %s12
  %15 = dma.vmem_to_smem %s13, 16, [#allocation4], [#allocation3]
  %s16 = sshll.u32 %s1, 4
  %s17 = int_to_ptr.vmem [resolvable:$true] %s16
  %19 = dma.vmem_to_smem %s17, 16, [#allocation5], [#allocation3]
  %20 = dma.done [#allocation3], 32
  %21 = sfence
  loop: start=0, step=1, limit=10
  $region2: #{jit_optimized_moe.2} parent=0 // loop_pre_header
    _
  $region3: #{jit_optimized_moe.2} parent=0 // loop_header
    %s23 = sphi 0, %s27
    %p24 = scmp.ge.s32.totalorder %s23, 10
    %s30 = sphi 0, %s42
    %s31 = sphi 0, %s38
    %s32 = sphi 0, %s30
    %s33 = sphi 0, %s31
    %s34 = sphi 0, %s32
    %s35 = sphi 0, %s33
    %s45 = sphi 0, %s47
    %s48 = sphi 0, %s45
    %s49 = sphi 0, %s48
    %s65 = sphi 0, %s49
    %s71 = sphi 0, %s73
    %s74 = sphi 0, %s71
    %s75 = sphi 0, %s74
    %s91 = sphi 0, %s75
    %s101 = sphi 0, %s103
    %s104 = sphi 0, %s101
    %s105 = sphi 0, %s104
    %s121 = sphi 0, %s105
    %s131 = sphi 0, %s133
    %s134 = sphi 0, %s131
    %s135 = sphi 0, %s134
    %s151 = sphi 0, %s135
    %s161 = sphi 0, %s163
    %s164 = sphi 0, %s161
    %s165 = sphi 0, %s164
    %s181 = sphi 0, %s165
    %s187 = sphi 0, %s189
    %s190 = sphi 0, %s187
    %s191 = sphi 0, %s190
    %s207 = sphi 0, %s191
  $region4: #{jit_optimized_moe.2} parent=0 // loop_header_branch
    %26 = sbr.rel (%p24) target = $region8
  $region5: #{jit_optimized_moe.2} parent=0 // loop_body
    %s28 = ssub.s32 %s23, 1
    %s29 = ssub.s32 %s23, 2
    %s36 = sadd.s32 1, %s31
    %p37 = scmp.ge.s32.totalorder %s36, 1
    %s38 = scalar_select %p37, 0, %s36
    %s39 = sadd.s32 1, %s30
    %s40 = scalar_select %p37, %s39, %s30
    %p41 = scmp.ge.s32.totalorder %s40, 8
    %s42 = scalar_select %p41, 0, %s40
    %s43 = ssub.s32 %s30, %s42
    %p44 = scmp.eq.s32.totalorder %s43, 0
    %s46 = sadd.s32 %s45, 1
    %s47 = scalar_select %p44, %s45, %s46
    %p50 = pneg %p44
    %p51 = scmp.eq.s32.totalorder %s23, 7
    %p52 = por %p50, %p51
    %p53 = scmp.ne.s32.totalorder %s45, %s48
    %p54 = scmp.eq.s32.totalorder %s23, 0
    %p55 = por %p53, %p54
    %p56 = scmp.ne.s32.totalorder %s45, %s48
    %p57 = scmp.eq.s32.totalorder %s28, 7
    %p58 = por %p56, %p57
    %p59 = scmp.ne.s32.totalorder %s48, %s49
    %p60 = scmp.eq.s32.totalorder %s28, 0
    %p61 = por %p59, %p60
    %p62 = scmp.ne.s32.totalorder %s48, %s49
    %p63 = scmp.eq.s32.totalorder %s29, 7
    %p64 = por %p62, %p63
    %p66 = scmp.ne.s32.totalorder %s49, %s65
    %p67 = scmp.eq.s32.totalorder %s29, 0
    %p68 = por %p66, %p67
    %s69 = ssub.s32 %s30, %s42
    %p70 = scmp.eq.s32.totalorder %s69, 0
    %s72 = sadd.s32 %s71, 1
    %s73 = scalar_select %p70, %s71, %s72
    %p76 = pneg %p70
    %p77 = scmp.eq.s32.totalorder %s23, 7
    %p78 = por %p76, %p77
    %p79 = scmp.ne.s32.totalorder %s71, %s74
    %p80 = scmp.eq.s32.totalorder %s23, 0
    %p81 = por %p79, %p80
    %p82 = scmp.ne.s32.totalorder %s71, %s74
    %p83 = scmp.eq.s32.totalorder %s28, 7
    %p84 = por %p82, %p83
    %p85 = scmp.ne.s32.totalorder %s74, %s75
    %p86 = scmp.eq.s32.totalorder %s28, 0
    %p87 = por %p85, %p86
    %p88 = scmp.ne.s32.totalorder %s74, %s75
    %p89 = scmp.eq.s32.totalorder %s29, 7
    %p90 = por %p88, %p89
    %p92 = scmp.ne.s32.totalorder %s75, %s91
    %p93 = scmp.eq.s32.totalorder %s29, 0
    %p94 = por %p92, %p93
    %s95 = sld [smem:[#allocation4 + %s30]]
    %s96 = sld [smem:[#allocation4 + %s42]]
    %s97 = ssub.s32 %s95, %s96
    %s98 = ssub.s32 %s31, %s38
    %s99 = sor.u32 %s97, %s98
    %p100 = scmp.eq.s32.totalorder %s99, 0
    %s102 = sadd.s32 %s101, 1
    %s103 = scalar_select %p100, %s101, %s102
    %p106 = pneg %p100
    %p107 = scmp.eq.s32.totalorder %s23, 7
    %p108 = por %p106, %p107
    %p109 = scmp.ne.s32.totalorder %s101, %s104
    %p110 = scmp.eq.s32.totalorder %s23, 0
    %p111 = por %p109, %p110
    %p112 = scmp.ne.s32.totalorder %s101, %s104
    %p113 = scmp.eq.s32.totalorder %s28, 7
    %p114 = por %p112, %p113
    %p115 = scmp.ne.s32.totalorder %s104, %s105
    %p116 = scmp.eq.s32.totalorder %s28, 0
    %p117 = por %p115, %p116
    %p118 = scmp.ne.s32.totalorder %s104, %s105
    %p119 = scmp.eq.s32.totalorder %s29, 7
    %p120 = por %p118, %p119
    %p122 = scmp.ne.s32.totalorder %s105, %s121
    %p123 = scmp.eq.s32.totalorder %s29, 0
    %p124 = por %p122, %p123
    %s125 = sld [smem:[#allocation4 + %s30]]
    %s126 = sld [smem:[#allocation4 + %s42]]
    %s127 = ssub.s32 %s125, %s126
    %s128 = ssub.s32 %s31, %s38
    %s129 = sor.u32 %s127, %s128
    %p130 = scmp.eq.s32.totalorder %s129, 0
    %s132 = sadd.s32 %s131, 1
    %s133 = scalar_select %p130, %s131, %s132
    %p136 = pneg %p130
    %p137 = scmp.eq.s32.totalorder %s23, 7
    %p138 = por %p136, %p137
    %p139 = scmp.ne.s32.totalorder %s131, %s134
    %p140 = scmp.eq.s32.totalorder %s23, 0
    %p141 = por %p139, %p140
    %p142 = scmp.ne.s32.totalorder %s131, %s134
    %p143 = scmp.eq.s32.totalorder %s28, 7
    %p144 = por %p142, %p143
    %p145 = scmp.ne.s32.totalorder %s134, %s135
    %p146 = scmp.eq.s32.totalorder %s28, 0
    %p147 = por %p145, %p146
    %p148 = scmp.ne.s32.totalorder %s134, %s135
    %p149 = scmp.eq.s32.totalorder %s29, 7
    %p150 = por %p148, %p149
    %p152 = scmp.ne.s32.totalorder %s135, %s151
    %p153 = scmp.eq.s32.totalorder %s29, 0
    %p154 = por %p152, %p153
    %s155 = sld [smem:[#allocation4 + %s30]]
    %s156 = sld [smem:[#allocation4 + %s42]]
    %s157 = ssub.s32 %s155, %s156
    %s158 = ssub.s32 %s31, %s38
    %s159 = sor.u32 %s157, %s158
    %p160 = scmp.eq.s32.totalorder %s159, 0
    %s162 = sadd.s32 %s161, 1
    %s163 = scalar_select %p160, %s161, %s162
    %p166 = pneg %p160
    %p167 = scmp.eq.s32.totalorder %s23, 7
    %p168 = por %p166, %p167
    %p169 = scmp.ne.s32.totalorder %s161, %s164
    %p170 = scmp.eq.s32.totalorder %s23, 0
    %p171 = por %p169, %p170
    %p172 = scmp.ne.s32.totalorder %s161, %s164
    %p173 = scmp.eq.s32.totalorder %s28, 7
    %p174 = por %p172, %p173
    %p175 = scmp.ne.s32.totalorder %s164, %s165
    %p176 = scmp.eq.s32.totalorder %s28, 0
    %p177 = por %p175, %p176
    %p178 = scmp.ne.s32.totalorder %s164, %s165
    %p179 = scmp.eq.s32.totalorder %s29, 7
    %p180 = por %p178, %p179
    %p182 = scmp.ne.s32.totalorder %s165, %s181
    %p183 = scmp.eq.s32.totalorder %s29, 0
    %p184 = por %p182, %p183
    %s185 = ssub.s32 %s30, %s42
    %p186 = scmp.eq.s32.totalorder %s185, 0
    %s188 = sadd.s32 %s187, 1
    %s189 = scalar_select %p186, %s187, %s188
    %p192 = pneg %p186
    %p193 = scmp.eq.s32.totalorder %s23, 7
    %p194 = por %p192, %p193
    %p195 = scmp.ne.s32.totalorder %s187, %s190
    %p196 = scmp.eq.s32.totalorder %s23, 0
    %p197 = por %p195, %p196
    %p198 = scmp.ne.s32.totalorder %s187, %s190
    %p199 = scmp.eq.s32.totalorder %s28, 7
    %p200 = por %p198, %p199
    %p201 = scmp.ne.s32.totalorder %s190, %s191
    %p202 = scmp.eq.s32.totalorder %s28, 0
    %p203 = por %p201, %p202
    %p204 = scmp.ne.s32.totalorder %s190, %s191
    %p205 = scmp.eq.s32.totalorder %s29, 7
    %p206 = por %p204, %p205
    %p208 = scmp.ne.s32.totalorder %s191, %s207
    %p209 = scmp.eq.s32.totalorder %s29, 0
    %p210 = por %p208, %p209
    %p211 = scmp.le.s32.totalorder 1, %s23
    %p212 = scmp.lt.s32.totalorder %s23, 9
    %p213 = pnand %p211, %p212
    %p214 = pneg %p213
    // Predicated region
    $region9: #{jit_optimized_moe.2} parent=5 // pred_check
      _
    $region10: #{jit_optimized_moe.2} parent=5 // pred_check_branch
      %216 = sbr.rel (%p213) target = $region12
    $region11: #{jit_optimized_moe.2} parent=5 // pred_region
      %s217 = ssub.s32 %s23, 1
    $region12: #{jit_optimized_moe.2} parent=5 // pred_fallthru
      _
    %p218 = scmp.lt.s32.totalorder %s23, 8
    // Predicated region
    $region13: #{jit_optimized_moe.2} parent=5 // pred_check
      %p219 = pneg %p218
    $region14: #{jit_optimized_moe.2} parent=5 // pred_check_branch
      %221 = sbr.rel (%p219) target = $region16
    $region15: #{jit_optimized_moe.2} parent=5 // pred_region
      // Predicated region
      $region17: #{jit_optimized_moe.2} parent=15 // pred_check
        %p222 = pneg %p55
      $region18: #{jit_optimized_moe.2} parent=15 // pred_check_branch
        %224 = sbr.rel (%p222) target = $region20
      $region19: #{jit_optimized_moe.2} parent=15 // pred_region
        %s225 = smul.u32 16, %s30
        %p226 = scmp.lt.s32.totalorder %s225, 127
        %s227 = scalar_select %p226, %s225, 127
        %s228 = smul.addr %s227, 4
        %s229 = scalar_lea.vmem %s2, %s228
        %s230 = smul.u32 16, %s30
      $region20: #{jit_optimized_moe.2} parent=15 // pred_fallthru
        _
      // Predicated region
      $region21: #{jit_optimized_moe.2} parent=15 // pred_check
        %p231 = pneg %p81
      $region22: #{jit_optimized_moe.2} parent=15 // pred_check_branch
        %233 = sbr.rel (%p231) target = $region24
      $region23: #{jit_optimized_moe.2} parent=15 // pred_region
        %s234 = smul.u32 16, %s30
        %p235 = scmp.lt.s32.totalorder %s234, 127
        %s236 = scalar_select %p235, %s234, 127
        %s237 = smul.addr %s236, 8
        %s238 = scalar_lea.vmem %s3, %s237
        %s239 = smul.u32 16, %s30
      $region24: #{jit_optimized_moe.2} parent=15 // pred_fallthru
        _
      // Predicated region
      $region25: #{jit_optimized_moe.2} parent=15 // pred_check
        %p240 = pneg %p111
      $region26: #{jit_optimized_moe.2} parent=15 // pred_check_branch
        %242 = sbr.rel (%p240) target = $region28
      $region27: #{jit_optimized_moe.2} parent=15 // pred_region
        %s243 = sld [smem:[#allocation4 + %s30]]
        %p244 = scmp.lt.s32.totalorder %s243, 7
        %s245 = scalar_select %p244, %s243, 7
        %p246 = scmp.lt.s32.totalorder %s31, 0
        %s247 = scalar_select %p246, %s31, 0
        %s248 = smul.addr %s245, 4
        %s249 = sadd.s32 %s247, %s248
        %s250 = smul.addr %s249, 4
        %s251 = scalar_lea.vmem %s4, %s250
        %s252 = sld [smem:[#allocation4 + %s30]]
      $region28: #{jit_optimized_moe.2} parent=15 // pred_fallthru
        _
      // Predicated region
      $region29: #{jit_optimized_moe.2} parent=15 // pred_check
        %p253 = pneg %p141
      $region30: #{jit_optimized_moe.2} parent=15 // pred_check_branch
        %255 = sbr.rel (%p253) target = $region32
      $region31: #{jit_optimized_moe.2} parent=15 // pred_region
        %s256 = sld [smem:[#allocation4 + %s30]]
        %p257 = scmp.lt.s32.totalorder %s256, 7
        %s258 = scalar_select %p257, %s256, 7
        %p259 = scmp.lt.s32.totalorder %s31, 0
        %s260 = scalar_select %p259, %s31, 0
        %s261 = smul.addr %s258, 4
        %s262 = sadd.s32 %s260, %s261
        %s263 = smul.addr %s262, 4
        %s264 = scalar_lea.vmem %s5, %s263
        %s265 = sld [smem:[#allocation4 + %s30]]
      $region32: #{jit_optimized_moe.2} parent=15 // pred_fallthru
        _
      // Predicated region
      $region33: #{jit_optimized_moe.2} parent=15 // pred_check
        %p266 = pneg %p171
      $region34: #{jit_optimized_moe.2} parent=15 // pred_check_branch
        %268 = sbr.rel (%p266) target = $region36
      $region35: #{jit_optimized_moe.2} parent=15 // pred_region
        %s269 = sld [smem:[#allocation4 + %s30]]
        %s270 = smul.u32 8, %s31
        %p271 = scmp.lt.s32.totalorder %s269, 7
        %s272 = scalar_select %p271, %s269, 7
        %p273 = scmp.lt.s32.totalorder %s270, 7
        %s274 = scalar_select %p273, %s270, 7
        %s275 = smul.addr %s272, 8
        %s276 = sadd.s32 %s274, %s275
        %s277 = smul.addr %s276, 4
        %s278 = scalar_lea.vmem %s6, %s277
        %s279 = sld [smem:[#allocation4 + %s30]]
        %s280 = smul.u32 8, %s31
      $region36: #{jit_optimized_moe.2} parent=15 // pred_fallthru
        _
    $region16: #{jit_optimized_moe.2} parent=5 // pred_fallthru
      _
    %p281 = scmp.le.s32.totalorder 1, %s23
    %p282 = scmp.lt.s32.totalorder %s23, 9
    %p283 = pnand %p281, %p282
    %p284 = pneg %p283
    // Predicated region
    $region37: #{jit_optimized_moe.2} parent=5 // pred_check
      _
    $region38: #{jit_optimized_moe.2} parent=5 // pred_check_branch
      %286 = sbr.rel (%p283) target = $region40
    $region39: #{jit_optimized_moe.2} parent=5 // pred_region
      %s287 = ssub.s32 %s23, 1
      %s288 = smul.u32 16, %s32
      %p289 = scmp.lt.s32.totalorder %s288, 127
      %s290 = scalar_select %p289, %s288, 127
      %s291 = smul.addr %s290, 4
      %s292 = scalar_lea.vmem %s2, %s291
      %p293 = pneg %p61
      %p294 = pneg %p58
      %s295 = smul.u32 16, %s32
      %p296 = scmp.lt.s32.totalorder %s295, 127
      %s297 = scalar_select %p296, %s295, 127
      %s298 = smul.addr %s297, 8
      %s299 = scalar_lea.vmem %s3, %s298
      %p300 = pneg %p87
      %p301 = pneg %p84
      %s302 = sld [smem:[#allocation4 + %s32]]
      %p303 = scmp.lt.s32.totalorder %s302, 7
      %s304 = scalar_select %p303, %s302, 7
      %p305 = scmp.lt.s32.totalorder %s33, 0
      %s306 = scalar_select %p305, %s33, 0
      %s307 = smul.addr %s304, 4
      %s308 = sadd.s32 %s306, %s307
      %s309 = smul.addr %s308, 4
      %s310 = scalar_lea.vmem %s4, %s309
      %p311 = pneg %p117
      %p312 = pneg %p114
      %s313 = sld [smem:[#allocation4 + %s32]]
      %p314 = scmp.lt.s32.totalorder %s313, 7
      %s315 = scalar_select %p314, %s313, 7
      %p316 = scmp.lt.s32.totalorder %s33, 0
      %s317 = scalar_select %p316, %s33, 0
      %s318 = smul.addr %s315, 4
      %s319 = sadd.s32 %s317, %s318
      %s320 = smul.addr %s319, 4
      %s321 = scalar_lea.vmem %s5, %s320
      %p322 = pneg %p147
      %p323 = pneg %p144
      %s324 = sld [smem:[#allocation4 + %s32]]
      %s325 = smul.u32 8, %s33
      %p326 = scmp.lt.s32.totalorder %s324, 7
      %s327 = scalar_select %p326, %s324, 7
      %p328 = scmp.lt.s32.totalorder %s325, 7
      %s329 = scalar_select %p328, %s325, 7
      %s330 = smul.addr %s327, 8
      %s331 = sadd.s32 %s329, %s330
      %s332 = smul.addr %s331, 4
      %s333 = scalar_lea.vmem %s6, %s332
      %p334 = pneg %p177
      %p335 = pneg %p174
      %p336 = pneg %p203
      %p337 = pneg %p200
      %s338 = smul.u32 16, %s32
      %p339 = scmp.lt.s32.totalorder %s338, 127
      %s340 = scalar_select %p339, %s338, 127
      %s341 = smul.addr %s340, 4
      %s342 = scalar_lea.vmem %s7, %s341
      %s343 = smul.u32 16, %s32
      %p344 = scmp.lt.s32.totalorder %s343, 127
      %s345 = scalar_select %p344, %s343, 127
      %s346 = smul.addr %s345, 4
      %s347 = scalar_lea.vmem %s2, %s346
      %s348 = smul.u32 16, %s32
      %s349 = smul.u32 16, %s32
      %p350 = scmp.lt.s32.totalorder %s349, 127
      %s351 = scalar_select %p350, %s349, 127
      %s352 = smul.addr %s351, 8
      %s353 = scalar_lea.vmem %s3, %s352
      %s354 = smul.u32 16, %s32
      %s355 = sld [smem:[#allocation4 + %s32]]
      %p356 = scmp.lt.s32.totalorder %s355, 7
      %s357 = scalar_select %p356, %s355, 7
      %p358 = scmp.lt.s32.totalorder %s33, 0
      %s359 = scalar_select %p358, %s33, 0
      %s360 = smul.addr %s357, 4
      %s361 = sadd.s32 %s359, %s360
      %s362 = smul.addr %s361, 4
      %s363 = scalar_lea.vmem %s4, %s362
      %s364 = sld [smem:[#allocation4 + %s32]]
      %s365 = sld [smem:[#allocation4 + %s32]]
      %p366 = scmp.lt.s32.totalorder %s365, 7
      %s367 = scalar_select %p366, %s365, 7
      %p368 = scmp.lt.s32.totalorder %s33, 0
      %s369 = scalar_select %p368, %s33, 0
      %s370 = smul.addr %s367, 4
      %s371 = sadd.s32 %s369, %s370
      %s372 = smul.addr %s371, 4
      %s373 = scalar_lea.vmem %s5, %s372
      %s374 = sld [smem:[#allocation4 + %s32]]
      %s375 = sld [smem:[#allocation4 + %s32]]
      %s376 = smul.u32 8, %s33
      %p377 = scmp.lt.s32.totalorder %s375, 7
      %s378 = scalar_select %p377, %s375, 7
      %p379 = scmp.lt.s32.totalorder %s376, 7
      %s380 = scalar_select %p379, %s376, 7
      %s381 = smul.addr %s378, 8
      %s382 = sadd.s32 %s380, %s381
      %s383 = smul.addr %s382, 4
      %s384 = scalar_lea.vmem %s6, %s383
      %s385 = sld [smem:[#allocation4 + %s32]]
      %s386 = smul.u32 8, %s33
      %s387 = smul.u32 16, %s32
      %p388 = scmp.lt.s32.totalorder %s387, 127
      %s389 = scalar_select %p388, %s387, 127
      %s390 = smul.addr %s389, 4
      %s391 = scalar_lea.vmem %s7, %s390
      %s392 = smul.u32 16, %s32
      %s394 = sld [smem:[#allocation5 + %s32]]
      %p395 = scmp.gt.s32.totalorder %s394, 0
      // Predicated region
      $region41: #{jit_optimized_moe.2} parent=39 // pred_check
        %p396 = pneg %p395
      $region42: #{jit_optimized_moe.2} parent=39 // pred_check_branch
        %398 = sbr.rel (%p396) target = $region44
      $region43: #{jit_optimized_moe.2} parent=39 // pred_region
        %v399 = vld [vmem:[%s347] sm:$0xf]
        %v400 = vld [vmem:[%s347 + $0x4] sm:$0xf]
        %v401 = vld [vmem:[%s347 + $0x8] sm:$0xf]
        %v402 = vld [vmem:[%s347 + $0xc] sm:$0xf]
        %v403 = vld [vmem:[%s347 + $0x10] sm:$0xf]
        %v404 = vld [vmem:[%s347 + $0x14] sm:$0xf]
        %v405 = vld [vmem:[%s347 + $0x18] sm:$0xf]
        %v406 = vld [vmem:[%s347 + $0x1c] sm:$0xf]
        %v407 = vld [vmem:[%s347 + $0x20] sm:$0xf]
        %v408 = vld [vmem:[%s347 + $0x24] sm:$0xf]
        %v409 = vld [vmem:[%s347 + $0x28] sm:$0xf]
        %v410 = vld [vmem:[%s347 + $0x2c] sm:$0xf]
        %v411 = vld [vmem:[%s347 + $0x30] sm:$0xf]
        %v412 = vld [vmem:[%s347 + $0x34] sm:$0xf]
        %v413 = vld [vmem:[%s347 + $0x38] sm:$0xf]
        %v414 = vld [vmem:[%s347 + $0x3c] sm:$0xf]
        %v415 = vld [vmem:[%s363] sm:$0xf]
        %v416 = vld [vmem:[%s363 + $0x4] sm:$0xf]
        %v417 = vld [vmem:[%s363 + $0x8] sm:$0xf]
        %v418 = vld [vmem:[%s363 + $0xc] sm:$0xf]
        %v435 = vunpack.c.l.b16 %v399
        %v436 = vunpack.c.l.b16 %v400
        %v437 = vunpack.c.l.b16 %v401
        %v438 = vunpack.c.l.b16 %v402
        %v439 = vunpack.c.l.b16 %v403
        %v440 = vunpack.c.l.b16 %v404
        %v441 = vunpack.c.l.b16 %v405
        %v442 = vunpack.c.l.b16 %v406
        %v443 = vunpack.c.l.b16 %v407
        %v444 = vunpack.c.l.b16 %v408
        %v445 = vunpack.c.l.b16 %v409
        %v446 = vunpack.c.l.b16 %v410
        %v447 = vunpack.c.l.b16 %v411
        %v448 = vunpack.c.l.b16 %v412
        %v449 = vunpack.c.l.b16 %v413
        %v450 = vunpack.c.l.b16 %v414
        %v451 = vpack.c.b16 %v436, %v435
        %v452 = vpack.c.b16 %v438, %v437
        %v453 = vpack.c.b16 %v440, %v439
        %v454 = vpack.c.b16 %v442, %v441
        %v455 = vpack.c.b16 %v444, %v443
        %v456 = vpack.c.b16 %v446, %v445
        %v457 = vpack.c.b16 %v448, %v447
        %v458 = vpack.c.b16 %v450, %v449
        %v463 = vunpack.c.l.b16 %v415
        %v464 = vunpack.c.l.b16 %v416
        %v465 = vunpack.c.l.b16 %v417
        %v466 = vunpack.c.l.b16 %v418
        %v467 = vpack.c.b16 %v464, %v463
        %v468 = vpack.c.b16 %v466, %v465
        %vm471 = vcmask 261120
        %v473 = vsel %vm471, %v451, 0
        %v476 = vsel %vm471, %v452, 0
        %v479 = vsel %vm471, %v453, 0
        %v482 = vsel %vm471, %v454, 0
        %v485 = vsel %vm471, %v455, 0
        %v488 = vsel %vm471, %v456, 0
        %v491 = vsel %vm471, %v457, 0
        %v494 = vsel %vm471, %v458, 0
        %496 = vmatprep.subr.bf16.mxu0 0
        %497 = vmatpush1.bf16.msra.mxu0 %v467
        %498 = vmatprep.subr.bf16.mxu0 0
        %499 = vmatpush1.bf16.msra.mxu0 %v468
        %500 = vmatprep.subr.bf16.mxu0 0
        %501 = vmatpush1.bf16.msra.mxu0 0
        %502 = vmatprep.subr.bf16.mxu0 0
        %503 = vmatpush1.bf16.msra.mxu0 0
        %504 = vmatprep.subr.bf16.mxu0 0
        %505 = vmatpush1.bf16.msra.mxu0 0
        %506 = vmatprep.subr.bf16.mxu0 0
        %507 = vmatpush1.bf16.msra.mxu0 0
        %508 = vmatprep.subr.bf16.mxu0 0
        %509 = vmatpush1.bf16.msra.mxu0 0
        %510 = vmatprep.subr.bf16.mxu0 0
        %511 = vmatpush1.bf16.msra.mxu0 0
        %512 = vmatprep.subr.bf16.mxu0 0
        %513 = vmatpush1.bf16.msra.mxu0 0
        %514 = vmatprep.subr.bf16.mxu0 0
        %515 = vmatpush1.bf16.msra.mxu0 0
        %516 = vmatprep.subr.bf16.mxu0 0
        %517 = vmatpush1.bf16.msra.mxu0 0
        %518 = vmatprep.subr.bf16.mxu0 0
        %519 = vmatpush1.bf16.msra.mxu0 0
        %520 = vmatprep.subr.bf16.mxu0 0
        %521 = vmatpush1.bf16.msra.mxu0 0
        %522 = vmatprep.subr.bf16.mxu0 0
        %523 = vmatpush1.bf16.msra.mxu0 0
        %524 = vmatprep.subr.bf16.mxu0 0
        %525 = vmatpush1.bf16.msra.mxu0 0
        %526 = vmatprep.subr.bf16.mxu0 0
        %527 = vmatpush1.bf16.msra.mxu0 0
        %528 = vmatprep.mubr.bf16.mxu0 0
        %529 = vmatmul.mubr.bf16.gmra.mrb[0].mxu0 %v473
        %v530 = vpop.f32.mrb[0].mxu0
        %v531 = vadd.f32 0.0, %v530
        %v532 = vpop.f32.mrb[0].mxu0
        %v533 = vpop.f32.mrb[0].mxu0
        %v534 = vadd.f32 0.0, %v533
        %v535 = vpop.f32.mrb[0].mxu0
        %536 = vmatprep.mubr.bf16.mxu0 0
        %537 = vmatmul.mubr.bf16.gmra.mrb[0].mxu0 %v476
        %v538 = vpop.f32.mrb[0].mxu0
        %v539 = vadd.f32 0.0, %v538
        %v540 = vpop.f32.mrb[0].mxu0
        %v541 = vpop.f32.mrb[0].mxu0
        %v542 = vadd.f32 0.0, %v541
        %v543 = vpop.f32.mrb[0].mxu0
        %544 = vmatprep.mubr.bf16.mxu0 0
        %545 = vmatmul.mubr.bf16.gmra.mrb[0].mxu0 %v479
        %v546 = vpop.f32.mrb[0].mxu0
        %v547 = vadd.f32 0.0, %v546
        %v548 = vpop.f32.mrb[0].mxu0
        %v549 = vpop.f32.mrb[0].mxu0
        %v550 = vadd.f32 0.0, %v549
        %v551 = vpop.f32.mrb[0].mxu0
        %552 = vmatprep.mubr.bf16.mxu0 0
        %553 = vmatmul.mubr.bf16.gmra.mrb[0].mxu0 %v482
        %v554 = vpop.f32.mrb[0].mxu0
        %v555 = vadd.f32 0.0, %v554
        %v556 = vpop.f32.mrb[0].mxu0
        %v557 = vpop.f32.mrb[0].mxu0
        %v558 = vadd.f32 0.0, %v557
        %v559 = vpop.f32.mrb[0].mxu0
        %560 = vmatprep.mubr.bf16.mxu0 0
        %561 = vmatmul.mubr.bf16.gmra.mrb[0].mxu0 %v485
        %v562 = vpop.f32.mrb[0].mxu0
        %v563 = vadd.f32 0.0, %v562
        %v564 = vpop.f32.mrb[0].mxu0
        %v565 = vpop.f32.mrb[0].mxu0
        %v566 = vadd.f32 0.0, %v565
        %v567 = vpop.f32.mrb[0].mxu0
        %568 = vmatprep.mubr.bf16.mxu0 0
        %569 = vmatmul.mubr.bf16.gmra.mrb[0].mxu0 %v488
        %v570 = vpop.f32.mrb[0].mxu0
        %v571 = vadd.f32 0.0, %v570
        %v572 = vpop.f32.mrb[0].mxu0
        %v573 = vpop.f32.mrb[0].mxu0
        %v574 = vadd.f32 0.0, %v573
        %v575 = vpop.f32.mrb[0].mxu0
        %576 = vmatprep.mubr.bf16.mxu0 0
        %577 = vmatmul.mubr.bf16.gmra.mrb[0].mxu0 %v491
        %v578 = vpop.f32.mrb[0].mxu0
        %v579 = vadd.f32 0.0, %v578
        %v580 = vpop.f32.mrb[0].mxu0
        %v581 = vpop.f32.mrb[0].mxu0
        %v582 = vadd.f32 0.0, %v581
        %v583 = vpop.f32.mrb[0].mxu0
        %584 = vmatprep.mubr.bf16.mxu0 0
        %585 = vmatmul.mubr.bf16.gmra.mrb[0].mxu0 %v494
        %v586 = vpop.f32.mrb[0].mxu0
        %v587 = vadd.f32 0.0, %v586
        %v588 = vpop.f32.mrb[0].mxu0
        %v589 = vpop.f32.mrb[0].mxu0
        %v590 = vadd.f32 0.0, %v589
        %v591 = vpop.f32.mrb[0].mxu0
        %592 = vdwg.mxu0
        %v593 = vld [vmem:[%s373] sm:$0xf]
        %v594 = vld [vmem:[%s373 + $0x4] sm:$0xf]
        %v595 = vld [vmem:[%s373 + $0x8] sm:$0xf]
        %v596 = vld [vmem:[%s373 + $0xc] sm:$0xf]
        %v601 = vunpack.c.l.b16 %v593
        %v602 = vunpack.c.l.b16 %v594
        %v603 = vunpack.c.l.b16 %v595
        %v604 = vunpack.c.l.b16 %v596
        %v605 = vpack.c.b16 %v602, %v601
        %v606 = vpack.c.b16 %v604, %v603
        %609 = vmatprep.subr.bf16.mxu0 0
        %610 = vmatpush1.bf16.msra.mxu0 %v605
        %611 = vmatprep.subr.bf16.mxu0 0
        %612 = vmatpush1.bf16.msra.mxu0 %v606
        %613 = vmatprep.subr.bf16.mxu0 0
        %614 = vmatpush1.bf16.msra.mxu0 0
        %615 = vmatprep.subr.bf16.mxu0 0
        %616 = vmatpush1.bf16.msra.mxu0 0
        %617 = vmatprep.subr.bf16.mxu0 0
        %618 = vmatpush1.bf16.msra.mxu0 0
        %619 = vmatprep.subr.bf16.mxu0 0
        %620 = vmatpush1.bf16.msra.mxu0 0
        %621 = vmatprep.subr.bf16.mxu0 0
        %622 = vmatpush1.bf16.msra.mxu0 0
        %623 = vmatprep.subr.bf16.mxu0 0
        %624 = vmatpush1.bf16.msra.mxu0 0
        %625 = vmatprep.subr.bf16.mxu0 0
        %626 = vmatpush1.bf16.msra.mxu0 0
        %627 = vmatprep.subr.bf16.mxu0 0
        %628 = vmatpush1.bf16.msra.mxu0 0
        %629 = vmatprep.subr.bf16.mxu0 0
        %630 = vmatpush1.bf16.msra.mxu0 0
        %631 = vmatprep.subr.bf16.mxu0 0
        %632 = vmatpush1.bf16.msra.mxu0 0
        %633 = vmatprep.subr.bf16.mxu0 0
        %634 = vmatpush1.bf16.msra.mxu0 0
        %635 = vmatprep.subr.bf16.mxu0 0
        %636 = vmatpush1.bf16.msra.mxu0 0
        %637 = vmatprep.subr.bf16.mxu0 0
        %638 = vmatpush1.bf16.msra.mxu0 0
        %639 = vmatprep.subr.bf16.mxu0 0
        %640 = vmatpush1.bf16.msra.mxu0 0
        %641 = vmatprep.mubr.bf16.mxu0 0
        %642 = vmatmul.mubr.bf16.gmra.mrb[0].mxu0 %v473
        %v643 = vpop.f32.mrb[0].mxu0
        %v644 = vadd.f32 0.0, %v643
        %v645 = vpop.f32.mrb[0].mxu0
        %v646 = vpop.f32.mrb[0].mxu0
        %v647 = vadd.f32 0.0, %v646
        %v648 = vpop.f32.mrb[0].mxu0
        %649 = vmatprep.mubr.bf16.mxu0 0
        %650 = vmatmul.mubr.bf16.gmra.mrb[0].mxu0 %v476
        %v651 = vpop.f32.mrb[0].mxu0
        %v652 = vadd.f32 0.0, %v651
        %v653 = vpop.f32.mrb[0].mxu0
        %v654 = vpop.f32.mrb[0].mxu0
        %v655 = vadd.f32 0.0, %v654
        %v656 = vpop.f32.mrb[0].mxu0
        %657 = vmatprep.mubr.bf16.mxu0 0
        %658 = vmatmul.mubr.bf16.gmra.mrb[0].mxu0 %v479
        %v659 = vpop.f32.mrb[0].mxu0
        %v660 = vadd.f32 0.0, %v659
        %v661 = vpop.f32.mrb[0].mxu0
        %v662 = vpop.f32.mrb[0].mxu0
        %v663 = vadd.f32 0.0, %v662
        %v664 = vpop.f32.mrb[0].mxu0
        %665 = vmatprep.mubr.bf16.mxu0 0
        %666 = vmatmul.mubr.bf16.gmra.mrb[0].mxu0 %v482
        %v667 = vpop.f32.mrb[0].mxu0
        %v668 = vadd.f32 0.0, %v667
        %v669 = vpop.f32.mrb[0].mxu0
        %v670 = vpop.f32.mrb[0].mxu0
        %v671 = vadd.f32 0.0, %v670
        %v672 = vpop.f32.mrb[0].mxu0
        %673 = vmatprep.mubr.bf16.mxu0 0
        %674 = vmatmul.mubr.bf16.gmra.mrb[0].mxu0 %v485
        %v675 = vpop.f32.mrb[0].mxu0
        %v676 = vadd.f32 0.0, %v675
        %v677 = vpop.f32.mrb[0].mxu0
        %v678 = vpop.f32.mrb[0].mxu0
        %v679 = vadd.f32 0.0, %v678
        %v680 = vpop.f32.mrb[0].mxu0
        %681 = vmatprep.mubr.bf16.mxu0 0
        %682 = vmatmul.mubr.bf16.gmra.mrb[0].mxu0 %v488
        %v683 = vpop.f32.mrb[0].mxu0
        %v684 = vadd.f32 0.0, %v683
        %v685 = vpop.f32.mrb[0].mxu0
        %v686 = vpop.f32.mrb[0].mxu0
        %v687 = vadd.f32 0.0, %v686
        %v688 = vpop.f32.mrb[0].mxu0
        %689 = vmatprep.mubr.bf16.mxu0 0
        %690 = vmatmul.mubr.bf16.gmra.mrb[0].mxu0 %v491
        %v691 = vpop.f32.mrb[0].mxu0
        %v692 = vadd.f32 0.0, %v691
        %v693 = vpop.f32.mrb[0].mxu0
        %v694 = vpop.f32.mrb[0].mxu0
        %v695 = vadd.f32 0.0, %v694
        %v696 = vpop.f32.mrb[0].mxu0
        %697 = vmatprep.mubr.bf16.mxu0 0
        %698 = vmatmul.mubr.bf16.gmra.mrb[0].mxu0 %v494
        %v699 = vpop.f32.mrb[0].mxu0
        %v700 = vadd.f32 0.0, %v699
        %v701 = vpop.f32.mrb[0].mxu0
        %v702 = vpop.f32.mrb[0].mxu0
        %v703 = vadd.f32 0.0, %v702
        %v704 = vpop.f32.mrb[0].mxu0
        %705 = vdwg.mxu0
        %v706 = vxor.u32 %v531, 2147483648
        %v707 = vxor.u32 %v534, 2147483648
        %v708 = vxor.u32 %v539, 2147483648
        %v709 = vxor.u32 %v542, 2147483648
        %v710 = vxor.u32 %v547, 2147483648
        %v711 = vxor.u32 %v550, 2147483648
        %v712 = vxor.u32 %v555, 2147483648
        %v713 = vxor.u32 %v558, 2147483648
        %v714 = vxor.u32 %v563, 2147483648
        %v715 = vxor.u32 %v566, 2147483648
        %v716 = vxor.u32 %v571, 2147483648
        %v717 = vxor.u32 %v574, 2147483648
        %v718 = vxor.u32 %v579, 2147483648
        %v719 = vxor.u32 %v582, 2147483648
        %v720 = vxor.u32 %v587, 2147483648
        %v721 = vxor.u32 %v590, 2147483648
        %v722 = vmul.f32 %v706, 1.442695
        %v723 = vpow.pop %v722
        %v724 = vmul.f32 %v707, 1.442695
        %v725 = vpow.pop %v724
        %v726 = vmul.f32 %v708, 1.442695
        %v727 = vpow.pop %v726
        %v728 = vmul.f32 %v709, 1.442695
        %v729 = vpow.pop %v728
        %v730 = vmul.f32 %v710, 1.442695
        %v731 = vpow.pop %v730
        %v732 = vmul.f32 %v711, 1.442695
        %v733 = vpow.pop %v732
        %v734 = vmul.f32 %v712, 1.442695
        %v735 = vpow.pop %v734
        %v736 = vmul.f32 %v713, 1.442695
        %v737 = vpow.pop %v736
        %v738 = vmul.f32 %v714, 1.442695
        %v739 = vpow.pop %v738
        %v740 = vmul.f32 %v715, 1.442695
        %v741 = vpow.pop %v740
        %v742 = vmul.f32 %v716, 1.442695
        %v743 = vpow.pop %v742
        %v744 = vmul.f32 %v717, 1.442695
        %v745 = vpow.pop %v744
        %v746 = vmul.f32 %v718, 1.442695
        %v747 = vpow.pop %v746
        %v748 = vmul.f32 %v719, 1.442695
        %v749 = vpow.pop %v748
        %v750 = vmul.f32 %v720, 1.442695
        %v751 = vpow.pop %v750
        %v752 = vmul.f32 %v721, 1.442695
        %v753 = vpow.pop %v752
        %v754 = vadd.f32 %v723, 1.0
        %v755 = vadd.f32 %v725, 1.0
        %v756 = vadd.f32 %v727, 1.0
        %v757 = vadd.f32 %v729, 1.0
        %v758 = vadd.f32 %v731, 1.0
        %v759 = vadd.f32 %v733, 1.0
        %v760 = vadd.f32 %v735, 1.0
        %v761 = vadd.f32 %v737, 1.0
        %v762 = vadd.f32 %v739, 1.0
        %v763 = vadd.f32 %v741, 1.0
        %v764 = vadd.f32 %v743, 1.0
        %v765 = vadd.f32 %v745, 1.0
        %v766 = vadd.f32 %v747, 1.0
        %v767 = vadd.f32 %v749, 1.0
        %v768 = vadd.f32 %v751, 1.0
        %v769 = vadd.f32 %v753, 1.0
        %v770 = vrcp.pop %v754
        %v771 = vmul.f32 1.0, %v770
        %v772 = vrcp.pop %v755
        %v773 = vmul.f32 1.0, %v772
        %v774 = vrcp.pop %v756
        %v775 = vmul.f32 1.0, %v774
        %v776 = vrcp.pop %v757
        %v777 = vmul.f32 1.0, %v776
        %v778 = vrcp.pop %v758
        %v779 = vmul.f32 1.0, %v778
        %v780 = vrcp.pop %v759
        %v781 = vmul.f32 1.0, %v780
        %v782 = vrcp.pop %v760
        %v783 = vmul.f32 1.0, %v782
        %v784 = vrcp.pop %v761
        %v785 = vmul.f32 1.0, %v784
        %v786 = vrcp.pop %v762
        %v787 = vmul.f32 1.0, %v786
        %v788 = vrcp.pop %v763
        %v789 = vmul.f32 1.0, %v788
        %v790 = vrcp.pop %v764
        %v791 = vmul.f32 1.0, %v790
        %v792 = vrcp.pop %v765
        %v793 = vmul.f32 1.0, %v792
        %v794 = vrcp.pop %v766
        %v795 = vmul.f32 1.0, %v794
        %v796 = vrcp.pop %v767
        %v797 = vmul.f32 1.0, %v796
        %v798 = vrcp.pop %v768
        %v799 = vmul.f32 1.0, %v798
        %v800 = vrcp.pop %v769
        %v801 = vmul.f32 1.0, %v800
        %v802 = vmul.f32 %v531, %v771
        %v803 = vmul.f32 %v534, %v773
        %v804 = vmul.f32 %v539, %v775
        %v805 = vmul.f32 %v542, %v777
        %v806 = vmul.f32 %v547, %v779
        %v807 = vmul.f32 %v550, %v781
        %v808 = vmul.f32 %v555, %v783
        %v809 = vmul.f32 %v558, %v785
        %v810 = vmul.f32 %v563, %v787
        %v811 = vmul.f32 %v566, %v789
        %v812 = vmul.f32 %v571, %v791
        %v813 = vmul.f32 %v574, %v793
        %v814 = vmul.f32 %v579, %v795
        %v815 = vmul.f32 %v582, %v797
        %v816 = vmul.f32 %v587, %v799
        %v817 = vmul.f32 %v590, %v801
        %v818 = vmul.f32 %v802, %v644
        %v819 = vmul.f32 %v803, %v647
        %v820 = vmul.f32 %v804, %v652
        %v821 = vmul.f32 %v805, %v655
        %v822 = vmul.f32 %v806, %v660
        %v823 = vmul.f32 %v807, %v663
        %v824 = vmul.f32 %v808, %v668
        %v825 = vmul.f32 %v809, %v671
        %v826 = vmul.f32 %v810, %v676
        %v827 = vmul.f32 %v811, %v679
        %v828 = vmul.f32 %v812, %v684
        %v829 = vmul.f32 %v813, %v687
        %v830 = vmul.f32 %v814, %v692
        %v831 = vmul.f32 %v815, %v695
        %v832 = vmul.f32 %v816, %v700
        %v833 = vmul.f32 %v817, %v703
        %v834 = vpack.c.bf16 %v819, %v818
        %v835 = vpack.c.bf16 %v821, %v820
        %v836 = vpack.c.bf16 %v823, %v822
        %v837 = vpack.c.bf16 %v825, %v824
        %v838 = vpack.c.bf16 %v827, %v826
        %v839 = vpack.c.bf16 %v829, %v828
        %v840 = vpack.c.bf16 %v831, %v830
        %v841 = vpack.c.bf16 %v833, %v832
        %v842 = vld [vmem:[%s384] sm:$0xf]
        %v843 = vld [vmem:[%s384 + $0x4] sm:$0xf]
        %v844 = vld [vmem:[%s384 + $0x8] sm:$0xf]
        %v845 = vld [vmem:[%s384 + $0xc] sm:$0xf]
        %v846 = vld [vmem:[%s384 + $0x10] sm:$0xf]
        %v847 = vld [vmem:[%s384 + $0x14] sm:$0xf]
        %v848 = vld [vmem:[%s384 + $0x18] sm:$0xf]
        %v849 = vld [vmem:[%s384 + $0x1c] sm:$0xf]
        %v858 = vunpack.c.l.b16 %v842
        %v859 = vunpack.c.l.b16 %v843
        %v860 = vunpack.c.l.b16 %v844
        %v861 = vunpack.c.l.b16 %v845
        %v862 = vunpack.c.l.b16 %v846
        %v863 = vunpack.c.l.b16 %v847
        %v864 = vunpack.c.l.b16 %v848
        %v865 = vunpack.c.l.b16 %v849
        %v866 = vpack.c.b16 %v859, %v858
        %v867 = vpack.c.b16 %v861, %v860
        %v868 = vpack.c.b16 %v863, %v862
        %v869 = vpack.c.b16 %v865, %v864
        %vm874 = vcmask 523264
        %v876 = vsel %vm874, %v834, 0
        %v879 = vsel %vm874, %v835, 0
        %v882 = vsel %vm874, %v836, 0
        %v885 = vsel %vm874, %v837, 0
        %v888 = vsel %vm874, %v838, 0
        %v891 = vsel %vm874, %v839, 0
        %v894 = vsel %vm874, %v840, 0
        %v897 = vsel %vm874, %v841, 0
        %899 = vmatprep.subr.bf16.mxu0 0
        %900 = vmatpush1.bf16.msra.mxu0 %v866
        %901 = vmatprep.subr.bf16.mxu0 0
        %902 = vmatpush1.bf16.msra.mxu0 %v867
        %903 = vmatprep.subr.bf16.mxu0 0
        %904 = vmatpush1.bf16.msra.mxu0 %v868
        %905 = vmatprep.subr.bf16.mxu0 0
        %906 = vmatpush1.bf16.msra.mxu0 %v869
        %907 = vmatprep.subr.bf16.mxu0 0
        %908 = vmatpush1.bf16.msra.mxu0 0
        %909 = vmatprep.subr.bf16.mxu0 0
        %910 = vmatpush1.bf16.msra.mxu0 0
        %911 = vmatprep.subr.bf16.mxu0 0
        %912 = vmatpush1.bf16.msra.mxu0 0
        %913 = vmatprep.subr.bf16.mxu0 0
        %914 = vmatpush1.bf16.msra.mxu0 0
        %915 = vmatprep.subr.bf16.mxu0 0
        %916 = vmatpush1.bf16.msra.mxu0 0
        %917 = vmatprep.subr.bf16.mxu0 0
        %918 = vmatpush1.bf16.msra.mxu0 0
        %919 = vmatprep.subr.bf16.mxu0 0
        %920 = vmatpush1.bf16.msra.mxu0 0
        %921 = vmatprep.subr.bf16.mxu0 0
        %922 = vmatpush1.bf16.msra.mxu0 0
        %923 = vmatprep.subr.bf16.mxu0 0
        %924 = vmatpush1.bf16.msra.mxu0 0
        %925 = vmatprep.subr.bf16.mxu0 0
        %926 = vmatpush1.bf16.msra.mxu0 0
        %927 = vmatprep.subr.bf16.mxu0 0
        %928 = vmatpush1.bf16.msra.mxu0 0
        %929 = vmatprep.subr.bf16.mxu0 0
        %930 = vmatpush1.bf16.msra.mxu0 0
        %931 = vmatprep.mubr.bf16.mxu0 0
        %932 = vmatmul.mubr.bf16.gmra.mrb[0].mxu0 %v876
        %v933 = vpop.f32.mrb[0].mxu0
        %v934 = vadd.f32 0.0, %v933
        %v935 = vpop.f32.mrb[0].mxu0
        %v936 = vpop.f32.mrb[0].mxu0
        %v937 = vadd.f32 0.0, %v936
        %v938 = vpop.f32.mrb[0].mxu0
        %939 = vmatprep.mubr.bf16.mxu0 0
        %940 = vmatmul.mubr.bf16.gmra.mrb[0].mxu0 %v879
        %v941 = vpop.f32.mrb[0].mxu0
        %v942 = vadd.f32 0.0, %v941
        %v943 = vpop.f32.mrb[0].mxu0
        %v944 = vpop.f32.mrb[0].mxu0
        %v945 = vadd.f32 0.0, %v944
        %v946 = vpop.f32.mrb[0].mxu0
        %947 = vmatprep.mubr.bf16.mxu0 0
        %948 = vmatmul.mubr.bf16.gmra.mrb[0].mxu0 %v882
        %v949 = vpop.f32.mrb[0].mxu0
        %v950 = vadd.f32 0.0, %v949
        %v951 = vpop.f32.mrb[0].mxu0
        %v952 = vpop.f32.mrb[0].mxu0
        %v953 = vadd.f32 0.0, %v952
        %v954 = vpop.f32.mrb[0].mxu0
        %955 = vmatprep.mubr.bf16.mxu0 0
        %956 = vmatmul.mubr.bf16.gmra.mrb[0].mxu0 %v885
        %v957 = vpop.f32.mrb[0].mxu0
        %v958 = vadd.f32 0.0, %v957
        %v959 = vpop.f32.mrb[0].mxu0
        %v960 = vpop.f32.mrb[0].mxu0
        %v961 = vadd.f32 0.0, %v960
        %v962 = vpop.f32.mrb[0].mxu0
        %963 = vmatprep.mubr.bf16.mxu0 0
        %964 = vmatmul.mubr.bf16.gmra.mrb[0].mxu0 %v888
        %v965 = vpop.f32.mrb[0].mxu0
        %v966 = vadd.f32 0.0, %v965
        %v967 = vpop.f32.mrb[0].mxu0
        %v968 = vpop.f32.mrb[0].mxu0
        %v969 = vadd.f32 0.0, %v968
        %v970 = vpop.f32.mrb[0].mxu0
        %971 = vmatprep.mubr.bf16.mxu0 0
        %972 = vmatmul.mubr.bf16.gmra.mrb[0].mxu0 %v891
        %v973 = vpop.f32.mrb[0].mxu0
        %v974 = vadd.f32 0.0, %v973
        %v975 = vpop.f32.mrb[0].mxu0
        %v976 = vpop.f32.mrb[0].mxu0
        %v977 = vadd.f32 0.0, %v976
        %v978 = vpop.f32.mrb[0].mxu0
        %979 = vmatprep.mubr.bf16.mxu0 0
        %980 = vmatmul.mubr.bf16.gmra.mrb[0].mxu0 %v894
        %v981 = vpop.f32.mrb[0].mxu0
        %v982 = vadd.f32 0.0, %v981
        %v983 = vpop.f32.mrb[0].mxu0
        %v984 = vpop.f32.mrb[0].mxu0
        %v985 = vadd.f32 0.0, %v984
        %v986 = vpop.f32.mrb[0].mxu0
        %987 = vmatprep.mubr.bf16.mxu0 0
        %988 = vmatmul.mubr.bf16.gmra.mrb[0].mxu0 %v897
        %v989 = vpop.f32.mrb[0].mxu0
        %v990 = vadd.f32 0.0, %v989
        %v991 = vpop.f32.mrb[0].mxu0
        %v992 = vpop.f32.mrb[0].mxu0
        %v993 = vadd.f32 0.0, %v992
        %v994 = vpop.f32.mrb[0].mxu0
        %995 = vdwg.mxu0
        %p996 = scmp.eq.s32.totalorder %s33, 0
        %v997 = vld [vmem:[#allocation2] sm:$0xff]
        %v998 = vld [vmem:[#allocation2 + $0x8] sm:$0xff]
        %v999 = vld [vmem:[#allocation2 + $0x10] sm:$0xff]
        %v1000 = vld [vmem:[#allocation2 + $0x18] sm:$0xff]
        %v1001 = vld [vmem:[#allocation2 + $0x20] sm:$0xff]
        %v1002 = vld [vmem:[#allocation2 + $0x28] sm:$0xff]
        %v1003 = vld [vmem:[#allocation2 + $0x30] sm:$0xff]
        %v1004 = vld [vmem:[#allocation2 + $0x38] sm:$0xff]
        %v1005 = vld [vmem:[#allocation2 + $0x40] sm:$0xff]
        %v1006 = vld [vmem:[#allocation2 + $0x48] sm:$0xff]
        %v1007 = vld [vmem:[#allocation2 + $0x50] sm:$0xff]
        %v1008 = vld [vmem:[#allocation2 + $0x58] sm:$0xff]
        %v1009 = vld [vmem:[#allocation2 + $0x60] sm:$0xff]
        %v1010 = vld [vmem:[#allocation2 + $0x68] sm:$0xff]
        %v1011 = vld [vmem:[#allocation2 + $0x70] sm:$0xff]
        %v1012 = vld [vmem:[#allocation2 + $0x78] sm:$0xff]
        %s1013 = scalar_select %p996, 1, 0
        %v1014 = vstv %s1013
        %vm1015 = vcmp.eq.s32.totalorder %v1014, 1
        %v1016 = vsel %vm1015, 0.0, %v997
        %v1017 = vsel %vm1015, 0.0, %v998
        %v1018 = vsel %vm1015, 0.0, %v999
        %v1019 = vsel %vm1015, 0.0, %v1000
        %v1020 = vsel %vm1015, 0.0, %v1001
        %v1021 = vsel %vm1015, 0.0, %v1002
        %v1022 = vsel %vm1015, 0.0, %v1003
        %v1023 = vsel %vm1015, 0.0, %v1004
        %v1024 = vsel %vm1015, 0.0, %v1005
        %v1025 = vsel %vm1015, 0.0, %v1006
        %v1026 = vsel %vm1015, 0.0, %v1007
        %v1027 = vsel %vm1015, 0.0, %v1008
        %v1028 = vsel %vm1015, 0.0, %v1009
        %v1029 = vsel %vm1015, 0.0, %v1010
        %v1030 = vsel %vm1015, 0.0, %v1011
        %v1031 = vsel %vm1015, 0.0, %v1012
        %v1032 = vadd.f32 %v1016, %v934
        %v1033 = vadd.f32 %v1017, %v937
        %v1034 = vadd.f32 %v1018, %v942
        %v1035 = vadd.f32 %v1019, %v945
        %v1036 = vadd.f32 %v1020, %v950
        %v1037 = vadd.f32 %v1021, %v953
        %v1038 = vadd.f32 %v1022, %v958
        %v1039 = vadd.f32 %v1023, %v961
        %v1040 = vadd.f32 %v1024, %v966
        %v1041 = vadd.f32 %v1025, %v969
        %v1042 = vadd.f32 %v1026, %v974
        %v1043 = vadd.f32 %v1027, %v977
        %v1044 = vadd.f32 %v1028, %v982
        %v1045 = vadd.f32 %v1029, %v985
        %v1046 = vadd.f32 %v1030, %v990
        %v1047 = vadd.f32 %v1031, %v993
        %1048 = vst.msk [vmem:[#allocation2] sm:$0xff] %vm471, %v1032
        %1049 = vst.msk [vmem:[#allocation2 + $0x8] sm:$0xff] %vm471, %v1033
        %1050 = vst.msk [vmem:[#allocation2 + $0x10] sm:$0xff] %vm471, %v1034
        %1051 = vst.msk [vmem:[#allocation2 + $0x18] sm:$0xff] %vm471, %v1035
        %1052 = vst.msk [vmem:[#allocation2 + $0x20] sm:$0xff] %vm471, %v1036
        %1053 = vst.msk [vmem:[#allocation2 + $0x28] sm:$0xff] %vm471, %v1037
        %1054 = vst.msk [vmem:[#allocation2 + $0x30] sm:$0xff] %vm471, %v1038
        %1055 = vst.msk [vmem:[#allocation2 + $0x38] sm:$0xff] %vm471, %v1039
        %1056 = vst.msk [vmem:[#allocation2 + $0x40] sm:$0xff] %vm471, %v1040
        %1057 = vst.msk [vmem:[#allocation2 + $0x48] sm:$0xff] %vm471, %v1041
        %1058 = vst.msk [vmem:[#allocation2 + $0x50] sm:$0xff] %vm471, %v1042
        %1059 = vst.msk [vmem:[#allocation2 + $0x58] sm:$0xff] %vm471, %v1043
        %1060 = vst.msk [vmem:[#allocation2 + $0x60] sm:$0xff] %vm471, %v1044
        %1061 = vst.msk [vmem:[#allocation2 + $0x68] sm:$0xff] %vm471, %v1045
        %1062 = vst.msk [vmem:[#allocation2 + $0x70] sm:$0xff] %vm471, %v1046
        %1063 = vst.msk [vmem:[#allocation2 + $0x78] sm:$0xff] %vm471, %v1047
      $region44: #{jit_optimized_moe.2} parent=39 // pred_fallthru
        _
      %p1064 = scmp.eq.s32.totalorder %s33, 0
      // Predicated region
      $region45: #{jit_optimized_moe.2} parent=39 // pred_check
        %p1065 = pneg %p1064
      $region46: #{jit_optimized_moe.2} parent=39 // pred_check_branch
        %1067 = sbr.rel (%p1065) target = $region48
      $region47: #{jit_optimized_moe.2} parent=39 // pred_region
        %v1068 = vld [vmem:[%s353] sm:$0xff]
        %v1069 = vld [vmem:[%s353 + $0x8] sm:$0xff]
        %v1070 = vld [vmem:[%s353 + $0x10] sm:$0xff]
        %v1071 = vld [vmem:[%s353 + $0x18] sm:$0xff]
        %v1072 = vld [vmem:[%s353 + $0x20] sm:$0xff]
        %v1073 = vld [vmem:[%s353 + $0x28] sm:$0xff]
        %v1074 = vld [vmem:[%s353 + $0x30] sm:$0xff]
        %v1075 = vld [vmem:[%s353 + $0x38] sm:$0xff]
        %v1076 = vld [vmem:[%s353 + $0x40] sm:$0xff]
        %v1077 = vld [vmem:[%s353 + $0x48] sm:$0xff]
        %v1078 = vld [vmem:[%s353 + $0x50] sm:$0xff]
        %v1079 = vld [vmem:[%s353 + $0x58] sm:$0xff]
        %v1080 = vld [vmem:[%s353 + $0x60] sm:$0xff]
        %v1081 = vld [vmem:[%s353 + $0x68] sm:$0xff]
        %v1082 = vld [vmem:[%s353 + $0x70] sm:$0xff]
        %v1083 = vld [vmem:[%s353 + $0x78] sm:$0xff]
        %vm1084 = vcmp.gt.f32.partialorder %v1068, 0.0
        %vm1085 = vcmp.gt.f32.partialorder %v1069, 0.0
        %vm1086 = vcmp.gt.f32.partialorder %v1070, 0.0
        %vm1087 = vcmp.gt.f32.partialorder %v1071, 0.0
        %vm1088 = vcmp.gt.f32.partialorder %v1072, 0.0
        %vm1089 = vcmp.gt.f32.partialorder %v1073, 0.0
        %vm1090 = vcmp.gt.f32.partialorder %v1074, 0.0
        %vm1091 = vcmp.gt.f32.partialorder %v1075, 0.0
        %vm1092 = vcmp.gt.f32.partialorder %v1076, 0.0
        %vm1093 = vcmp.gt.f32.partialorder %v1077, 0.0
        %vm1094 = vcmp.gt.f32.partialorder %v1078, 0.0
        %vm1095 = vcmp.gt.f32.partialorder %v1079, 0.0
        %vm1096 = vcmp.gt.f32.partialorder %v1080, 0.0
        %vm1097 = vcmp.gt.f32.partialorder %v1081, 0.0
        %vm1098 = vcmp.gt.f32.partialorder %v1082, 0.0
        %vm1099 = vcmp.gt.f32.partialorder %v1083, 0.0
        %v1100 = vld [vmem:[#allocation2] sm:$0xff]
        %v1101 = vld [vmem:[#allocation2 + $0x8] sm:$0xff]
        %v1102 = vld [vmem:[#allocation2 + $0x10] sm:$0xff]
        %v1103 = vld [vmem:[#allocation2 + $0x18] sm:$0xff]
        %v1104 = vld [vmem:[#allocation2 + $0x20] sm:$0xff]
        %v1105 = vld [vmem:[#allocation2 + $0x28] sm:$0xff]
        %v1106 = vld [vmem:[#allocation2 + $0x30] sm:$0xff]
        %v1107 = vld [vmem:[#allocation2 + $0x38] sm:$0xff]
        %v1108 = vld [vmem:[#allocation2 + $0x40] sm:$0xff]
        %v1109 = vld [vmem:[#allocation2 + $0x48] sm:$0xff]
        %v1110 = vld [vmem:[#allocation2 + $0x50] sm:$0xff]
        %v1111 = vld [vmem:[#allocation2 + $0x58] sm:$0xff]
        %v1112 = vld [vmem:[#allocation2 + $0x60] sm:$0xff]
        %v1113 = vld [vmem:[#allocation2 + $0x68] sm:$0xff]
        %v1114 = vld [vmem:[#allocation2 + $0x70] sm:$0xff]
        %v1115 = vld [vmem:[#allocation2 + $0x78] sm:$0xff]
        %1117 = vset.pattern.permute.xlu0 0
        %1118 = vperm.xlu0 %1117, %v1068
        %v1119 = vpop.permute.xlu0 %1118
        %1122 = vset.pattern.permute.xlu0 0
        %1123 = vperm.xlu0 %1122, %v1069
        %v1124 = vpop.permute.xlu0 %1123
        %1127 = vset.pattern.permute.xlu0 0
        %1128 = vperm.xlu0 %1127, %v1070
        %v1129 = vpop.permute.xlu0 %1128
        %1132 = vset.pattern.permute.xlu0 0
        %1133 = vperm.xlu0 %1132, %v1071
        %v1134 = vpop.permute.xlu0 %1133
        %1137 = vset.pattern.permute.xlu0 0
        %1138 = vperm.xlu0 %1137, %v1072
        %v1139 = vpop.permute.xlu0 %1138
        %1142 = vset.pattern.permute.xlu0 0
        %1143 = vperm.xlu0 %1142, %v1073
        %v1144 = vpop.permute.xlu0 %1143
        %1147 = vset.pattern.permute.xlu0 0
        %1148 = vperm.xlu0 %1147, %v1074
        %v1149 = vpop.permute.xlu0 %1148
        %1152 = vset.pattern.permute.xlu0 0
        %1153 = vperm.xlu0 %1152, %v1075
        %v1154 = vpop.permute.xlu0 %1153
        %1157 = vset.pattern.permute.xlu0 0
        %1158 = vperm.xlu0 %1157, %v1076
        %v1159 = vpop.permute.xlu0 %1158
        %1162 = vset.pattern.permute.xlu0 0
        %1163 = vperm.xlu0 %1162, %v1077
        %v1164 = vpop.permute.xlu0 %1163
        %1167 = vset.pattern.permute.xlu0 0
        %1168 = vperm.xlu0 %1167, %v1078
        %v1169 = vpop.permute.xlu0 %1168
        %1172 = vset.pattern.permute.xlu0 0
        %1173 = vperm.xlu0 %1172, %v1079
        %v1174 = vpop.permute.xlu0 %1173
        %1177 = vset.pattern.permute.xlu0 0
        %1178 = vperm.xlu0 %1177, %v1080
        %v1179 = vpop.permute.xlu0 %1178
        %1182 = vset.pattern.permute.xlu0 0
        %1183 = vperm.xlu0 %1182, %v1081
        %v1184 = vpop.permute.xlu0 %1183
        %1187 = vset.pattern.permute.xlu0 0
        %1188 = vperm.xlu0 %1187, %v1082
        %v1189 = vpop.permute.xlu0 %1188
        %1192 = vset.pattern.permute.xlu0 0
        %1193 = vperm.xlu0 %1192, %v1083
        %v1194 = vpop.permute.xlu0 %1193
        %v1196 = vmul.f32 %v1100, %v1119
        %v1197 = vmul.f32 %v1101, %v1124
        %v1198 = vmul.f32 %v1102, %v1129
        %v1199 = vmul.f32 %v1103, %v1134
        %v1200 = vmul.f32 %v1104, %v1139
        %v1201 = vmul.f32 %v1105, %v1144
        %v1202 = vmul.f32 %v1106, %v1149
        %v1203 = vmul.f32 %v1107, %v1154
        %v1204 = vmul.f32 %v1108, %v1159
        %v1205 = vmul.f32 %v1109, %v1164
        %v1206 = vmul.f32 %v1110, %v1169
        %v1207 = vmul.f32 %v1111, %v1174
        %v1208 = vmul.f32 %v1112, %v1179
        %v1209 = vmul.f32 %v1113, %v1184
        %v1210 = vmul.f32 %v1114, %v1189
        %v1211 = vmul.f32 %v1115, %v1194
        %v1212 = vsel %vm1084, 1, 0
        %v1213 = vsel %vm1085, 1, 0
        %v1214 = vsel %vm1086, 1, 0
        %v1215 = vsel %vm1087, 1, 0
        %v1216 = vsel %vm1088, 1, 0
        %v1217 = vsel %vm1089, 1, 0
        %v1218 = vsel %vm1090, 1, 0
        %v1219 = vsel %vm1091, 1, 0
        %v1220 = vsel %vm1092, 1, 0
        %v1221 = vsel %vm1093, 1, 0
        %v1222 = vsel %vm1094, 1, 0
        %v1223 = vsel %vm1095, 1, 0
        %v1224 = vsel %vm1096, 1, 0
        %v1225 = vsel %vm1097, 1, 0
        %v1226 = vsel %vm1098, 1, 0
        %v1227 = vsel %vm1099, 1, 0
        %1228 = vset.pattern.permute.xlu0 0
        %1229 = vperm.xlu0 %1228, %v1212
        %v1230 = vpop.permute.xlu0 %1229
        %1231 = vset.pattern.permute.xlu0 0
        %1232 = vperm.xlu0 %1231, %v1213
        %v1233 = vpop.permute.xlu0 %1232
        %1234 = vset.pattern.permute.xlu0 0
        %1235 = vperm.xlu0 %1234, %v1214
        %v1236 = vpop.permute.xlu0 %1235
        %1237 = vset.pattern.permute.xlu0 0
        %1238 = vperm.xlu0 %1237, %v1215
        %v1239 = vpop.permute.xlu0 %1238
        %1240 = vset.pattern.permute.xlu0 0
        %1241 = vperm.xlu0 %1240, %v1216
        %v1242 = vpop.permute.xlu0 %1241
        %1243 = vset.pattern.permute.xlu0 0
        %1244 = vperm.xlu0 %1243, %v1217
        %v1245 = vpop.permute.xlu0 %1244
        %1246 = vset.pattern.permute.xlu0 0
        %1247 = vperm.xlu0 %1246, %v1218
        %v1248 = vpop.permute.xlu0 %1247
        %1249 = vset.pattern.permute.xlu0 0
        %1250 = vperm.xlu0 %1249, %v1219
        %v1251 = vpop.permute.xlu0 %1250
        %1252 = vset.pattern.permute.xlu0 0
        %1253 = vperm.xlu0 %1252, %v1220
        %v1254 = vpop.permute.xlu0 %1253
        %1255 = vset.pattern.permute.xlu0 0
        %1256 = vperm.xlu0 %1255, %v1221
        %v1257 = vpop.permute.xlu0 %1256
        %1258 = vset.pattern.permute.xlu0 0
        %1259 = vperm.xlu0 %1258, %v1222
        %v1260 = vpop.permute.xlu0 %1259
        %1261 = vset.pattern.permute.xlu0 0
        %1262 = vperm.xlu0 %1261, %v1223
        %v1263 = vpop.permute.xlu0 %1262
        %1264 = vset.pattern.permute.xlu0 0
        %1265 = vperm.xlu0 %1264, %v1224
        %v1266 = vpop.permute.xlu0 %1265
        %1267 = vset.pattern.permute.xlu0 0
        %1268 = vperm.xlu0 %1267, %v1225
        %v1269 = vpop.permute.xlu0 %1268
        %1270 = vset.pattern.permute.xlu0 0
        %1271 = vperm.xlu0 %1270, %v1226
        %v1272 = vpop.permute.xlu0 %1271
        %1273 = vset.pattern.permute.xlu0 0
        %1274 = vperm.xlu0 %1273, %v1227
        %v1275 = vpop.permute.xlu0 %1274
        %vm1276 = vcmp.eq.s32.totalorder %v1230, 1
        %vm1277 = vcmp.eq.s32.totalorder %v1233, 1
        %vm1278 = vcmp.eq.s32.totalorder %v1236, 1
        %vm1279 = vcmp.eq.s32.totalorder %v1239, 1
        %vm1280 = vcmp.eq.s32.totalorder %v1242, 1
        %vm1281 = vcmp.eq.s32.totalorder %v1245, 1
        %vm1282 = vcmp.eq.s32.totalorder %v1248, 1
        %vm1283 = vcmp.eq.s32.totalorder %v1251, 1
        %vm1284 = vcmp.eq.s32.totalorder %v1254, 1
        %vm1285 = vcmp.eq.s32.totalorder %v1257, 1
        %vm1286 = vcmp.eq.s32.totalorder %v1260, 1
        %vm1287 = vcmp.eq.s32.totalorder %v1263, 1
        %vm1288 = vcmp.eq.s32.totalorder %v1266, 1
        %vm1289 = vcmp.eq.s32.totalorder %v1269, 1
        %vm1290 = vcmp.eq.s32.totalorder %v1272, 1
        %vm1291 = vcmp.eq.s32.totalorder %v1275, 1
        %v1292 = vsel %vm1276, %v1196, 0.0
        %v1293 = vsel %vm1277, %v1197, 0.0
        %v1294 = vsel %vm1278, %v1198, 0.0
        %v1295 = vsel %vm1279, %v1199, 0.0
        %v1296 = vsel %vm1280, %v1200, 0.0
        %v1297 = vsel %vm1281, %v1201, 0.0
        %v1298 = vsel %vm1282, %v1202, 0.0
        %v1299 = vsel %vm1283, %v1203, 0.0
        %v1300 = vsel %vm1284, %v1204, 0.0
        %v1301 = vsel %vm1285, %v1205, 0.0
        %v1302 = vsel %vm1286, %v1206, 0.0
        %v1303 = vsel %vm1287, %v1207, 0.0
        %v1304 = vsel %vm1288, %v1208, 0.0
        %v1305 = vsel %vm1289, %v1209, 0.0
        %v1306 = vsel %vm1290, %v1210, 0.0
        %v1307 = vsel %vm1291, %v1211, 0.0
        %v1308 = vpack.c.bf16 %v1293, %v1292
        %v1309 = vpack.c.bf16 %v1295, %v1294
        %v1310 = vpack.c.bf16 %v1297, %v1296
        %v1311 = vpack.c.bf16 %v1299, %v1298
        %v1312 = vpack.c.bf16 %v1301, %v1300
        %v1313 = vpack.c.bf16 %v1303, %v1302
        %v1314 = vpack.c.bf16 %v1305, %v1304
        %v1315 = vpack.c.bf16 %v1307, %v1306
        %v1324 = vunpack.c.l.b16 %v1308
        %v1325 = vunpack.c.h.b16 %v1308
        %v1326 = vunpack.c.l.b16 %v1309
        %v1327 = vunpack.c.h.b16 %v1309
        %v1328 = vunpack.c.l.b16 %v1310
        %v1329 = vunpack.c.h.b16 %v1310
        %v1330 = vunpack.c.l.b16 %v1311
        %v1331 = vunpack.c.h.b16 %v1311
        %v1332 = vunpack.c.l.b16 %v1312
        %v1333 = vunpack.c.h.b16 %v1312
        %v1334 = vunpack.c.l.b16 %v1313
        %v1335 = vunpack.c.h.b16 %v1313
        %v1336 = vunpack.c.l.b16 %v1314
        %v1337 = vunpack.c.h.b16 %v1314
        %v1338 = vunpack.c.l.b16 %v1315
        %v1339 = vunpack.c.h.b16 %v1315
        %v1340 = vpack.c.b16 %v1324, %v1324
        %v1341 = vpack.c.b16 %v1325, %v1325
        %v1342 = vpack.c.b16 %v1326, %v1326
        %v1343 = vpack.c.b16 %v1327, %v1327
        %v1344 = vpack.c.b16 %v1328, %v1328
        %v1345 = vpack.c.b16 %v1329, %v1329
        %v1346 = vpack.c.b16 %v1330, %v1330
        %v1347 = vpack.c.b16 %v1331, %v1331
        %v1348 = vpack.c.b16 %v1332, %v1332
        %v1349 = vpack.c.b16 %v1333, %v1333
        %v1350 = vpack.c.b16 %v1334, %v1334
        %v1351 = vpack.c.b16 %v1335, %v1335
        %v1352 = vpack.c.b16 %v1336, %v1336
        %v1353 = vpack.c.b16 %v1337, %v1337
        %v1354 = vpack.c.b16 %v1338, %v1338
        %v1355 = vpack.c.b16 %v1339, %v1339
        %vm1372 = vcmask 257024
        %1373 = vst.msk [vmem:[%s391] sm:$0xf] %vm1372, %v1340
        %1374 = vst.msk [vmem:[%s391 + $0x4] sm:$0xf] %vm1372, %v1341
        %1375 = vst.msk [vmem:[%s391 + $0x8] sm:$0xf] %vm1372, %v1342
        %1376 = vst.msk [vmem:[%s391 + $0xc] sm:$0xf] %vm1372, %v1343
        %1377 = vst.msk [vmem:[%s391 + $0x10] sm:$0xf] %vm1372, %v1344
        %1378 = vst.msk [vmem:[%s391 + $0x14] sm:$0xf] %vm1372, %v1345
        %1379 = vst.msk [vmem:[%s391 + $0x18] sm:$0xf] %vm1372, %v1346
        %1380 = vst.msk [vmem:[%s391 + $0x1c] sm:$0xf] %vm1372, %v1347
        %1381 = vst.msk [vmem:[%s391 + $0x20] sm:$0xf] %vm1372, %v1348
        %1382 = vst.msk [vmem:[%s391 + $0x24] sm:$0xf] %vm1372, %v1349
        %1383 = vst.msk [vmem:[%s391 + $0x28] sm:$0xf] %vm1372, %v1350
        %1384 = vst.msk [vmem:[%s391 + $0x2c] sm:$0xf] %vm1372, %v1351
        %1385 = vst.msk [vmem:[%s391 + $0x30] sm:$0xf] %vm1372, %v1352
        %1386 = vst.msk [vmem:[%s391 + $0x34] sm:$0xf] %vm1372, %v1353
        %1387 = vst.msk [vmem:[%s391 + $0x38] sm:$0xf] %vm1372, %v1354
        %1388 = vst.msk [vmem:[%s391 + $0x3c] sm:$0xf] %vm1372, %v1355
      $region48: #{jit_optimized_moe.2} parent=39 // pred_fallthru
        _
      %s1389 = smul.u32 16, %s32
      %p1390 = scmp.lt.s32.totalorder %s1389, 127
      %s1391 = scalar_select %p1390, %s1389, 127
      %s1392 = smul.addr %s1391, 4
      %s1393 = scalar_lea.vmem %s7, %s1392
      // Predicated region
      $region49: #{jit_optimized_moe.2} parent=39 // pred_check
        %p1394 = pneg %p200
      $region50: #{jit_optimized_moe.2} parent=39 // pred_check_branch
        %1396 = sbr.rel (%p1394) target = $region52
      $region51: #{jit_optimized_moe.2} parent=39 // pred_region
        %s1397 = smul.u32 16, %s32
      $region52: #{jit_optimized_moe.2} parent=39 // pred_fallthru
        _
    $region40: #{jit_optimized_moe.2} parent=5 // pred_fallthru
      _
    %p1398 = scmp.le.s32.totalorder 2, %s23
    // Predicated region
    $region53: #{jit_optimized_moe.2} parent=5 // pred_check
      %p1399 = pneg %p1398
    $region54: #{jit_optimized_moe.2} parent=5 // pred_check_branch
      %1401 = sbr.rel (%p1399) target = $region56
    $region55: #{jit_optimized_moe.2} parent=5 // pred_region
      %s1402 = ssub.s32 %s23, 2
      // Predicated region
      $region57: #{jit_optimized_moe.2} parent=55 // pred_check
        %p1403 = pneg %p206
      $region58: #{jit_optimized_moe.2} parent=55 // pred_check_branch
        %1405 = sbr.rel (%p1403) target = $region60
      $region59: #{jit_optimized_moe.2} parent=55 // pred_region
        %s1406 = smul.u32 16, %s34
        %p1407 = scmp.lt.s32.totalorder %s1406, 127
        %s1408 = scalar_select %p1407, %s1406, 127
        %s1409 = smul.addr %s1408, 4
        %s1410 = scalar_lea.vmem %s7, %s1409
      $region60: #{jit_optimized_moe.2} parent=55 // pred_fallthru
        _
    $region56: #{jit_optimized_moe.2} parent=5 // pred_fallthru
      _
  $region6: #{jit_optimized_moe.2} parent=0 // loop_footer
    %s27 = sadd.s32 1, %s23
  $region7: #{jit_optimized_moe.2} parent=0 // loop_footer_branch
    %22 = sbr.rel target = $region3
  $region8: #{jit_optimized_moe.2} parent=0 // loop_exit
    _

</llo_original>
